<compile_context>
chip_gen: v6e
topology: v6e:2x2x1
jax: 0.10.0
libtpu: 0.0.40
codegen_flags: <defaults>
</compile_context>

<pallas_src>
import jax
import jax.numpy as jnp
from jax.experimental import pallas as pl
from jax.experimental.pallas import tpu as pltpu


def mlp_kernel(x_ref, w1_ref, b1_ref, w2_ref, b2_ref,
               w3_ref, b3_ref, w4_ref, b4_ref, out_ref):
    # All four Linear layers + ReLUs fused, one batch tile per grid step.
    # Weights are bf16 (halved HBM traffic); activations cast to bf16 only
    # as MXU operands, accumulation and bias/ReLU math stay in f32.
    x = x_ref[...]
    h = jnp.dot(x.astype(jnp.bfloat16), w1_ref[...],
                preferred_element_type=jnp.float32) + b1_ref[...]
    h = jnp.maximum(h, 0.0)
    h = jnp.dot(h.astype(jnp.bfloat16), w2_ref[...],
                preferred_element_type=jnp.float32) + b2_ref[...]
    h = jnp.maximum(h, 0.0)
    h = jnp.dot(h.astype(jnp.bfloat16), w3_ref[...],
                preferred_element_type=jnp.float32) + b3_ref[...]
    h = jnp.maximum(h, 0.0)
    h = jnp.dot(h.astype(jnp.bfloat16), w4_ref[...],
                preferred_element_type=jnp.float32) + b4_ref[...]
    out_ref[...] = h.astype(out_ref.dtype)


def base_model_forward(x_nchw, params, *, tm=256):
    """x_nchw: (B, 3, 32, 32) float32. Returns (B, n_classes) float32 logits."""
    B = x_nchw.shape[0]
    in_features = 32 * 32 * 3
    x = x_nchw.reshape(B, in_features)  # same semantics as torch .view(-1, 3072)

    w1, b1, w2, b2, w3, b3, w4, b4 = params
    n_classes = w4.shape[1]

    # Pad the final layer's output dim to 128 lanes -> unmasked lane-dense
    # stores for the output tile; sliced back after the call.
    n_pad = max(128, n_classes)
    if n_pad != n_classes:
        w4p = jnp.zeros((w4.shape[0], n_pad), w4.dtype).at[:, :n_classes].set(w4)
        b4p = jnp.zeros((1, n_pad), b4.dtype).at[:, :n_classes].set(b4)
    else:
        w4p, b4p = w4, b4

    # Batch tile: multiple of 8 (sublane), shrink for tiny batches, cap at
    # `tm` (default 256: fits comfortably in v7x's 64 MiB VMEM while staying
    # near the HBM roofline; v5e/v6e have even more headroom).
    tm = min(tm, max(8, ((B + 7) // 8) * 8))
    b_padded = ((B + tm - 1) // tm) * tm
    if b_padded != B:
        x = jnp.pad(x, ((0, b_padded - B), (0, 0)))

    grid = (b_padded // tm,)

    def resident(shape):
        # Constant index_map: block == full array, DMA'd once and kept in VMEM
        # across all grid steps.
        return pl.BlockSpec(shape, lambda i: (0,) * len(shape))

    out = pl.pallas_call(
        mlp_kernel,
        out_shape=jax.ShapeDtypeStruct((b_padded, n_pad), jnp.float32),
        grid=grid,
        in_specs=[
            pl.BlockSpec((tm, in_features), lambda i: (i, 0)),  # pipelined x tile
            resident(w1.shape), resident(b1.shape),
            resident(w2.shape), resident(b2.shape),
            resident(w3.shape), resident(b3.shape),
            resident(w4p.shape), resident(b4p.shape),
        ],
        out_specs=pl.BlockSpec((tm, n_pad), lambda i: (i, 0)),
        compiler_params=pltpu.CompilerParams(
            dimension_semantics=("parallel",),       # megacore sharding on v7x
            vmem_limit_bytes=32 * 1024 * 1024,       # safe on v5e/v6e/v7x
        ),
    )(x, w1, b1, w2, b2, w3, b3, w4p, b4p)

    return out[:B, :n_classes]


def init_params(key, input_sz, hidden_dim, n_classes):
    """Deterministic init; weights stored (in, out) in bf16, biases (1, out) f32."""
    dims = [input_sz, hidden_dim * 2, hidden_dim, hidden_dim // 2, n_classes]
    params = []
    for i in range(4):
        key, kw, kb = jax.random.split(key, 3)
        fan_in, fan_out = dims[i], dims[i + 1]
        bound = 1.0 / (fan_in ** 0.5)  # PyTorch nn.Linear default scale
        w = jax.random.uniform(kw, (fan_in, fan_out), jnp.float32, -bound, bound)
        b = jax.random.uniform(kb, (1, fan_out), jnp.float32, -bound, bound)
        params += [w.astype(jnp.bfloat16), b]  # bf16 weights halve HBM traffic
    return tuple(params)


def reference_forward(x_nchw, params):
    """Plain-JAX reference with the same bf16-operand / f32-accum math."""
    B = x_nchw.shape[0]
    h = x_nchw.reshape(B, 32 * 32 * 3)
    w1, b1, w2, b2, w3, b3, w4, b4 = params
    layers = [(w1, b1, True), (w2, b2, True), (w3, b3, True), (w4, b4, False)]
    for w, b, relu in layers:
        h = jnp.dot(h.astype(jnp.bfloat16), w,
                    preferred_element_type=jnp.float32) + b
        if relu:
            h = jnp.maximum(h, 0.0)
    return h


if __name__ == "__main__":
    key = jax.random.PRNGKey(0)
    k_x, k_x2, k_p = jax.random.split(key, 3)

    input_sz = 32 * 32 * 3   # forward hardcodes view(-1, 32*32*3)
    hidden_dim = 64
    n_classes = 10

    params = init_params(k_p, input_sz, hidden_dim, n_classes)

    # Small batch (single grid step).
    x = jax.random.normal(k_x, (8, 3, 32, 32), jnp.float32)  # NCHW
    out = base_model_forward(x, params)
    jax.block_until_ready(out)
    ref = reference_forward(x, params)
    assert out.shape == (8, n_classes)
    assert jnp.allclose(out, ref, atol=1e-3, rtol=1e-3)

    # Larger, non-multiple-of-tile batch (exercises grid pipelining + tail pad).
    x2 = jax.random.normal(k_x2, (300, 3, 32, 32), jnp.float32)
    out2 = base_model_forward(x2, params)
    jax.block_until_ready(out2)
    ref2 = reference_forward(x2, params)
    assert out2.shape == (300, n_classes)
    assert jnp.allclose(out2, ref2, atol=1e-3, rtol=1e-3)

    print("KERNEL_OK")
</pallas_src>

<mosaic_0001>
module attributes {stable_mosaic.version = 11 : i64} {
  func.func @mlp_kernel(%arg0: i32, %arg1: memref<8x3072xf32, #tpu.memory_space<vmem>>, %arg2: memref<3072x128xbf16, #tpu.memory_space<vmem>>, %arg3: memref<1x128xf32, #tpu.memory_space<vmem>>, %arg4: memref<128x64xbf16, #tpu.memory_space<vmem>>, %arg5: memref<1x64xf32, #tpu.memory_space<vmem>>, %arg6: memref<64x32xbf16, #tpu.memory_space<vmem>>, %arg7: memref<1x32xf32, #tpu.memory_space<vmem>>, %arg8: memref<32x128xbf16, #tpu.memory_space<vmem>>, %arg9: memref<1x128xf32, #tpu.memory_space<vmem>>, %arg10: memref<8x128xf32, #tpu.memory_space<vmem>>) attributes {dimension_semantics = [#tpu.dimension_semantics<parallel>], iteration_bounds = array<i64: 1>, scalar_prefetch = 0 : i64, scratch_operands = 0 : i64, tpu.core_type = #tpu.core_type<tc>, window_params = [{transform_indices = @transform_0, window_bounds = array<i64: 8, 3072>}, {pipeline_mode = #tpu.pipeline_mode<synchronous>, transform_indices = @transform_1, window_bounds = array<i64: 3072, 128>}, {pipeline_mode = #tpu.pipeline_mode<synchronous>, transform_indices = @transform_2, window_bounds = array<i64: 1, 128>}, {pipeline_mode = #tpu.pipeline_mode<synchronous>, transform_indices = @transform_3, window_bounds = array<i64: 128, 64>}, {pipeline_mode = #tpu.pipeline_mode<synchronous>, transform_indices = @transform_4, window_bounds = array<i64: 1, 64>}, {pipeline_mode = #tpu.pipeline_mode<synchronous>, transform_indices = @transform_5, window_bounds = array<i64: 64, 32>}, {pipeline_mode = #tpu.pipeline_mode<synchronous>, transform_indices = @transform_6, window_bounds = array<i64: 1, 32>}, {pipeline_mode = #tpu.pipeline_mode<synchronous>, transform_indices = @transform_7, window_bounds = array<i64: 32, 128>}, {pipeline_mode = #tpu.pipeline_mode<synchronous>, transform_indices = @transform_8, window_bounds = array<i64: 1, 128>}, {transform_indices = @transform_9, window_bounds = array<i64: 8, 128>}]} {
    %c0 = arith.constant 0 : index
    %c0_0 = arith.constant 0 : index
    %0 = vector.load %arg1[%c0, %c0_0] : memref<8x3072xf32, #tpu.memory_space<vmem>>, vector<8x3072xf32>
    %1 = arith.truncf %0 : vector<8x3072xf32> to vector<8x3072xbf16>
    %c0_1 = arith.constant 0 : index
    %c0_2 = arith.constant 0 : index
    %2 = vector.load %arg2[%c0_1, %c0_2] : memref<3072x128xbf16, #tpu.memory_space<vmem>>, vector<3072x128xbf16>
    %cst = arith.constant dense<0.000000e+00> : vector<8x128xf32>
    %3 = tpu.matmul %1, %2, %cst {dimension_numbers = #tpu.dot_dimension_numbers<[1], [0], [0], [1], [0, 0, 1, 1], [], []>} : vector<8x3072xbf16>, vector<3072x128xbf16>, vector<8x128xf32> -> vector<8x128xf32>
    %c0_3 = arith.constant 0 : index
    %c0_4 = arith.constant 0 : index
    %4 = vector.load %arg3[%c0_3, %c0_4] : memref<1x128xf32, #tpu.memory_space<vmem>>, vector<1x128xf32>
    %5 = vector.broadcast %4 : vector<1x128xf32> to vector<8x128xf32>
    %6 = arith.addf %3, %5 : vector<8x128xf32>
    %cst_5 = arith.constant 0.000000e+00 : f32
    %7 = vector.broadcast %cst_5 : f32 to vector<8x128xf32>
    %8 = arith.maximumf %6, %7 : vector<8x128xf32>
    %9 = arith.truncf %8 : vector<8x128xf32> to vector<8x128xbf16>
    %c0_6 = arith.constant 0 : index
    %c0_7 = arith.constant 0 : index
    %10 = vector.load %arg4[%c0_6, %c0_7] : memref<128x64xbf16, #tpu.memory_space<vmem>>, vector<128x64xbf16>
    %cst_8 = arith.constant dense<0.000000e+00> : vector<8x64xf32>
    %11 = tpu.matmul %9, %10, %cst_8 {dimension_numbers = #tpu.dot_dimension_numbers<[1], [0], [0], [1], [0, 0, 1, 1], [], []>} : vector<8x128xbf16>, vector<128x64xbf16>, vector<8x64xf32> -> vector<8x64xf32>
    %c0_9 = arith.constant 0 : index
    %c0_10 = arith.constant 0 : index
    %12 = vector.load %arg5[%c0_9, %c0_10] : memref<1x64xf32, #tpu.memory_space<vmem>>, vector<1x64xf32>
    %13 = vector.broadcast %12 : vector<1x64xf32> to vector<8x64xf32>
    %14 = arith.addf %11, %13 : vector<8x64xf32>
    %cst_11 = arith.constant 0.000000e+00 : f32
    %15 = vector.broadcast %cst_11 : f32 to vector<8x64xf32>
    %16 = arith.maximumf %14, %15 : vector<8x64xf32>
    %17 = arith.truncf %16 : vector<8x64xf32> to vector<8x64xbf16>
    %c0_12 = arith.constant 0 : index
    %c0_13 = arith.constant 0 : index
    %18 = vector.load %arg6[%c0_12, %c0_13] : memref<64x32xbf16, #tpu.memory_space<vmem>>, vector<64x32xbf16>
    %cst_14 = arith.constant dense<0.000000e+00> : vector<8x32xf32>
    %19 = tpu.matmul %17, %18, %cst_14 {dimension_numbers = #tpu.dot_dimension_numbers<[1], [0], [0], [1], [0, 0, 1, 1], [], []>} : vector<8x64xbf16>, vector<64x32xbf16>, vector<8x32xf32> -> vector<8x32xf32>
    %c0_15 = arith.constant 0 : index
    %c0_16 = arith.constant 0 : index
    %20 = vector.load %arg7[%c0_15, %c0_16] : memref<1x32xf32, #tpu.memory_space<vmem>>, vector<1x32xf32>
    %21 = vector.broadcast %20 : vector<1x32xf32> to vector<8x32xf32>
    %22 = arith.addf %19, %21 : vector<8x32xf32>
    %cst_17 = arith.constant 0.000000e+00 : f32
    %23 = vector.broadcast %cst_17 : f32 to vector<8x32xf32>
    %24 = arith.maximumf %22, %23 : vector<8x32xf32>
    %25 = arith.truncf %24 : vector<8x32xf32> to vector<8x32xbf16>
    %c0_18 = arith.constant 0 : index
    %c0_19 = arith.constant 0 : index
    %26 = vector.load %arg8[%c0_18, %c0_19] : memref<32x128xbf16, #tpu.memory_space<vmem>>, vector<32x128xbf16>
    %cst_20 = arith.constant dense<0.000000e+00> : vector<8x128xf32>
    %27 = tpu.matmul %25, %26, %cst_20 {dimension_numbers = #tpu.dot_dimension_numbers<[1], [0], [0], [1], [0, 0, 1, 1], [], []>} : vector<8x32xbf16>, vector<32x128xbf16>, vector<8x128xf32> -> vector<8x128xf32>
    %c0_21 = arith.constant 0 : index
    %c0_22 = arith.constant 0 : index
    %28 = vector.load %arg9[%c0_21, %c0_22] : memref<1x128xf32, #tpu.memory_space<vmem>>, vector<1x128xf32>
    %29 = vector.broadcast %28 : vector<1x128xf32> to vector<8x128xf32>
    %30 = arith.addf %27, %29 : vector<8x128xf32>
    %c0_23 = arith.constant 0 : index
    %c0_24 = arith.constant 0 : index
    %31 = vector.load %arg10[%c0_23, %c0_24] : memref<8x128xf32, #tpu.memory_space<vmem>>, vector<8x128xf32>
    tpu.vector_store %arg10[%c0_23, %c0_24], %30 {strides = array<i32>} : memref<8x128xf32, #tpu.memory_space<vmem>>, vector<8x128xf32>,
    return
  }
  func.func @transform_0(%arg0: i32) -> (i32, i32) {
    %c0_i32 = arith.constant 0 : i32
    %c0_i32_0 = arith.constant 0 : i32
    return %arg0, %c0_i32 : i32, i32
  }
  func.func @transform_1(%arg0: i32) -> (i32, i32) {
    %c0_i32 = arith.constant 0 : i32
    %c0_i32_0 = arith.constant 0 : i32
    %c0_i32_1 = arith.constant 0 : i32
    return %c0_i32, %c0_i32_0 : i32, i32
  }
  func.func @transform_2(%arg0: i32) -> (i32, i32) {
    %c0_i32 = arith.constant 0 : i32
    %c0_i32_0 = arith.constant 0 : i32
    %c0_i32_1 = arith.constant 0 : i32
    return %c0_i32, %c0_i32_0 : i32, i32
  }
  func.func @transform_3(%arg0: i32) -> (i32, i32) {
    %c0_i32 = arith.constant 0 : i32
    %c0_i32_0 = arith.constant 0 : i32
    %c0_i32_1 = arith.constant 0 : i32
    return %c0_i32, %c0_i32_0 : i32, i32
  }
  func.func @transform_4(%arg0: i32) -> (i32, i32) {
    %c0_i32 = arith.constant 0 : i32
    %c0_i32_0 = arith.constant 0 : i32
    %c0_i32_1 = arith.constant 0 : i32
    return %c0_i32, %c0_i32_0 : i32, i32
  }
  func.func @transform_5(%arg0: i32) -> (i32, i32) {
    %c0_i32 = arith.constant 0 : i32
    %c0_i32_0 = arith.constant 0 : i32
    %c0_i32_1 = arith.constant 0 : i32
    return %c0_i32, %c0_i32_0 : i32, i32
  }
  func.func @transform_6(%arg0: i32) -> (i32, i32) {
    %c0_i32 = arith.constant 0 : i32
    %c0_i32_0 = arith.constant 0 : i32
    %c0_i32_1 = arith.constant 0 : i32
    return %c0_i32, %c0_i32_0 : i32, i32
  }
  func.func @transform_7(%arg0: i32) -> (i32, i32) {
    %c0_i32 = arith.constant 0 : i32
    %c0_i32_0 = arith.constant 0 : i32
    %c0_i32_1 = arith.constant 0 : i32
    return %c0_i32, %c0_i32_0 : i32, i32
  }
  func.func @transform_8(%arg0: i32) -> (i32, i32) {
    %c0_i32 = arith.constant 0 : i32
    %c0_i32_0 = arith.constant 0 : i32
    %c0_i32_1 = arith.constant 0 : i32
    return %c0_i32, %c0_i32_0 : i32, i32
  }
  func.func @transform_9(%arg0: i32) -> (i32, i32) {
    %c0_i32 = arith.constant 0 : i32
    %c0_i32_0 = arith.constant 0 : i32
    return %arg0, %c0_i32 : i32, i32
  }
}

</mosaic_0001>

<llo_original>
// kernel: tpu_custom_call.1
$region0: #{tpu_custom_call.1}
  #allocation0 [shape = 'u32[]', space=smem, size = 0x4, offset = 0x4, fixed_abs, tag = 'smem constant byte address 0x4 - core index']
  #allocation1 [shape = 'u32[144,128]{1,0:T(1,128)}', space=vmem, size = 0x12000, scoped, tag = 'internal scratch']
  %s0 = inlined_call_operand.hbm [shape: f32[8,3072], index: 0, kind: input, shape index: {}]
  %s1 = inlined_call_operand.hbm [shape: bf16[3072,128], index: 1, kind: input, shape index: {}]
  %s2 = inlined_call_operand.vmem [shape: f32[1,128], index: 2, kind: input, shape index: {}]
  %s3 = inlined_call_operand.vmem [shape: bf16[128,64], index: 3, kind: input, shape index: {}]
  %s4 = inlined_call_operand.vmem [shape: f32[1,64], index: 4, kind: input, shape index: {}]
  %s5 = inlined_call_operand.vmem [shape: bf16[64,32], index: 5, kind: input, shape index: {}]
  %s6 = inlined_call_operand.vmem [shape: f32[1,32], index: 6, kind: input, shape index: {}]
  %s7 = inlined_call_operand.vmem [shape: bf16[32,128], index: 7, kind: input, shape index: {}]
  %s8 = inlined_call_operand.vmem [shape: f32[1,128], index: 8, kind: input, shape index: {}]
  %s9 = inlined_call_operand.hbm [shape: f32[8,128], index: 9, kind: output, shape index: {}]
  %s10 = sld [smem:[#allocation0]]
  $region54: #{tpu_custom_call.1} parent=0
    _
  %s12 = ssub.s32 1, %s10
  %s13 = scalar_select 0, %s12, %s10
  $region1: #{tpu_custom_call.1} parent=0
    #allocation2 [shape = 'u8[98304]{0}', space=vmem, size = 0x18000, scoped, tag = 'input window, operand 0, single buffered']
    #allocation3 [shape = 's32[1]{0}', space=sflag, size = 0x4, scoped, tag = 'scoped memory for tpu_custom_call.1']
    #allocation4 [shape = 's32[1]{0}', space=sflag, size = 0x4, scoped, tag = 'scoped memory for tpu_custom_call.1']
    #allocation5 [shape = 'u8[786432]{0}', space=vmem, size = 0xc0000, scoped, tag = 'input window, operand 1, single buffered']
    #allocation6 [shape = 's32[1]{0}', space=sflag, size = 0x4, scoped, tag = 'scoped memory for tpu_custom_call.1']
    #allocation7 [shape = 'u8[4096]{0}', space=vmem, size = 0x1000, scoped, tag = 'output window, operand 0, single buffered']
    %14 = vsyncpa [#allocation3], 0
    %15 = vsyncpa [#allocation6], 0
    %16 = vsyncpa [#allocation4], 0
    // Predicated region
    $region2: #{tpu_custom_call.1} parent=1 // pred_check
      _
    $region3: #{tpu_custom_call.1} parent=1 // pred_check_branch
      %18 = sbr.rel (0) target = $region5
    $region4: #{tpu_custom_call.1} parent=1 // pred_region
      %s20 = ssub.s32 3072, 3072
      %21 = vsyncadd [#allocation3], %s20
      %s23 = sshll.u32 [#allocation2], 4
      %s24 = int_to_ptr.vmem [resolvable:$true] %s23
      %26 = dma.hbm_to_vmem [thread:$0]  %s0, 3072, %s24, [#allocation3]
    $region5: #{tpu_custom_call.1} parent=1 // pred_fallthru
      _
    // Predicated region
    $region6: #{tpu_custom_call.1} parent=1 // pred_check
      _
    $region7: #{tpu_custom_call.1} parent=1 // pred_check_branch
      %28 = sbr.rel (0) target = $region9
    $region8: #{tpu_custom_call.1} parent=1 // pred_region
      %s30 = ssub.s32 24576, 24576
      %31 = vsyncadd [#allocation6], %s30
      %s32 = sshll.u32 [#allocation5], 4
      %s33 = int_to_ptr.vmem [resolvable:$true] %s32
      %38 = dma.hbm_to_vmem [thread:$0]  %s1, 24576, %s33, [#allocation6], 64, 64, 4
    $region9: #{tpu_custom_call.1} parent=1 // pred_fallthru
      _
    // Predicated region
    $region10: #{tpu_custom_call.1} parent=1 // pred_check
      _
    $region11: #{tpu_custom_call.1} parent=1 // pred_check_branch
      %40 = sbr.rel (0) target = $region13
    $region12: #{tpu_custom_call.1} parent=1 // pred_region
      _
    $region13: #{tpu_custom_call.1} parent=1 // pred_fallthru
      _
    // Predicated region
    $region14: #{tpu_custom_call.1} parent=1 // pred_check
      _
    $region15: #{tpu_custom_call.1} parent=1 // pred_check_branch
      %42 = sbr.rel (0) target = $region17
    $region16: #{tpu_custom_call.1} parent=1 // pred_region
      _
    $region17: #{tpu_custom_call.1} parent=1 // pred_fallthru
      _
    // Predicated region
    $region18: #{tpu_custom_call.1} parent=1 // pred_check
      _
    $region19: #{tpu_custom_call.1} parent=1 // pred_check_branch
      %44 = sbr.rel (0) target = $region21
    $region20: #{tpu_custom_call.1} parent=1 // pred_region
      _
    $region21: #{tpu_custom_call.1} parent=1 // pred_fallthru
      _
    // Predicated region
    $region22: #{tpu_custom_call.1} parent=1 // pred_check
      _
    $region23: #{tpu_custom_call.1} parent=1 // pred_check_branch
      %46 = sbr.rel (0) target = $region25
    $region24: #{tpu_custom_call.1} parent=1 // pred_region
      _
    $region25: #{tpu_custom_call.1} parent=1 // pred_fallthru
      _
    // Predicated region
    $region26: #{tpu_custom_call.1} parent=1 // pred_check
      _
    $region27: #{tpu_custom_call.1} parent=1 // pred_check_branch
      %48 = sbr.rel (0) target = $region29
    $region28: #{tpu_custom_call.1} parent=1 // pred_region
      _
    $region29: #{tpu_custom_call.1} parent=1 // pred_fallthru
      _
    // Predicated region
    $region30: #{tpu_custom_call.1} parent=1 // pred_check
      _
    $region31: #{tpu_custom_call.1} parent=1 // pred_check_branch
      %50 = sbr.rel (0) target = $region33
    $region32: #{tpu_custom_call.1} parent=1 // pred_region
      _
    $region33: #{tpu_custom_call.1} parent=1 // pred_fallthru
      _
    // Predicated region
    $region34: #{tpu_custom_call.1} parent=1 // pred_check
      _
    $region35: #{tpu_custom_call.1} parent=1 // pred_check_branch
      %52 = sbr.rel (0) target = $region37
    $region36: #{tpu_custom_call.1} parent=1 // pred_region
      _
    $region37: #{tpu_custom_call.1} parent=1 // pred_fallthru
      _
    // Predicated region
    $region38: #{tpu_custom_call.1} parent=1 // pred_check
      _
    $region39: #{tpu_custom_call.1} parent=1 // pred_check_branch
      %54 = sbr.rel (0) target = $region41
    $region40: #{tpu_custom_call.1} parent=1 // pred_region
      %55 = dma.done [#allocation3], 3072
    $region41: #{tpu_custom_call.1} parent=1 // pred_fallthru
      _
    // Predicated region
    $region42: #{tpu_custom_call.1} parent=1 // pred_check
      _
    $region43: #{tpu_custom_call.1} parent=1 // pred_check_branch
      %57 = sbr.rel (0) target = $region45
    $region44: #{tpu_custom_call.1} parent=1 // pred_region
      %58 = dma.done [#allocation6], 24576
    $region45: #{tpu_custom_call.1} parent=1 // pred_fallthru
      _
    %v60 = vld [vmem:[#allocation2] sm:$0xff]
    %v61 = vld [vmem:[#allocation2 + $0x8] sm:$0xff]
    %v62 = vld [vmem:[#allocation2 + $0x10] sm:$0xff]
    %v63 = vld [vmem:[#allocation2 + $0x18] sm:$0xff]
    %v64 = vld [vmem:[#allocation2 + $0x20] sm:$0xff]
    %v65 = vld [vmem:[#allocation2 + $0x28] sm:$0xff]
    %v66 = vld [vmem:[#allocation2 + $0x30] sm:$0xff]
    %v67 = vld [vmem:[#allocation2 + $0x38] sm:$0xff]
    %v68 = vld [vmem:[#allocation2 + $0x40] sm:$0xff]
    %v69 = vld [vmem:[#allocation2 + $0x48] sm:$0xff]
    %v70 = vld [vmem:[#allocation2 + $0x50] sm:$0xff]
    %v71 = vld [vmem:[#allocation2 + $0x58] sm:$0xff]
    %v72 = vld [vmem:[#allocation2 + $0x60] sm:$0xff]
    %v73 = vld [vmem:[#allocation2 + $0x68] sm:$0xff]
    %v74 = vld [vmem:[#allocation2 + $0x70] sm:$0xff]
    %v75 = vld [vmem:[#allocation2 + $0x78] sm:$0xff]
    %v76 = vld [vmem:[#allocation2 + $0x80] sm:$0xff]
    %v77 = vld [vmem:[#allocation2 + $0x88] sm:$0xff]
    %v78 = vld [vmem:[#allocation2 + $0x90] sm:$0xff]
    %v79 = vld [vmem:[#allocation2 + $0x98] sm:$0xff]
    %v80 = vld [vmem:[#allocation2 + $0xa0] sm:$0xff]
    %v81 = vld [vmem:[#allocation2 + $0xa8] sm:$0xff]
    %v82 = vld [vmem:[#allocation2 + $0xb0] sm:$0xff]
    %v83 = vld [vmem:[#allocation2 + $0xb8] sm:$0xff]
    %v84 = vpack.c.bf16 %v60, %v60
    %v85 = vpack.c.bf16 %v61, %v61
    %v86 = vpack.c.bf16 %v62, %v62
    %v87 = vpack.c.bf16 %v63, %v63
    %v88 = vpack.c.bf16 %v64, %v64
    %v89 = vpack.c.bf16 %v65, %v65
    %v90 = vpack.c.bf16 %v66, %v66
    %v91 = vpack.c.bf16 %v67, %v67
    %v92 = vpack.c.bf16 %v68, %v68
    %v93 = vpack.c.bf16 %v69, %v69
    %v94 = vpack.c.bf16 %v70, %v70
    %v95 = vpack.c.bf16 %v71, %v71
    %v96 = vpack.c.bf16 %v72, %v72
    %v97 = vpack.c.bf16 %v73, %v73
    %v98 = vpack.c.bf16 %v74, %v74
    %v99 = vpack.c.bf16 %v75, %v75
    %v100 = vpack.c.bf16 %v76, %v76
    %v101 = vpack.c.bf16 %v77, %v77
    %v102 = vpack.c.bf16 %v78, %v78
    %v103 = vpack.c.bf16 %v79, %v79
    %v104 = vpack.c.bf16 %v80, %v80
    %v105 = vpack.c.bf16 %v81, %v81
    %v106 = vpack.c.bf16 %v82, %v82
    %v107 = vpack.c.bf16 %v83, %v83
    %v108 = vld [vmem:[#allocation5] sm:$0xf]
    %v109 = vld [vmem:[#allocation5 + $0x4] sm:$0xf]
    %v110 = vld [vmem:[#allocation5 + $0x8] sm:$0xf]
    %v111 = vld [vmem:[#allocation5 + $0xc] sm:$0xf]
    %v112 = vld [vmem:[#allocation5 + $0x10] sm:$0xf]
    %v113 = vld [vmem:[#allocation5 + $0x14] sm:$0xf]
    %v114 = vld [vmem:[#allocation5 + $0x18] sm:$0xf]
    %v115 = vld [vmem:[#allocation5 + $0x1c] sm:$0xf]
    %v116 = vld [vmem:[#allocation5 + $0x20] sm:$0xf]
    %v117 = vld [vmem:[#allocation5 + $0x24] sm:$0xf]
    %v118 = vld [vmem:[#allocation5 + $0x28] sm:$0xf]
    %v119 = vld [vmem:[#allocation5 + $0x2c] sm:$0xf]
    %v120 = vld [vmem:[#allocation5 + $0x30] sm:$0xf]
    %v121 = vld [vmem:[#allocation5 + $0x34] sm:$0xf]
    %v122 = vld [vmem:[#allocation5 + $0x38] sm:$0xf]
    %v123 = vld [vmem:[#allocation5 + $0x3c] sm:$0xf]
    %v124 = vld [vmem:[#allocation5 + $0x40] sm:$0xf]
    %v125 = vld [vmem:[#allocation5 + $0x44] sm:$0xf]
    %v126 = vld [vmem:[#allocation5 + $0x48] sm:$0xf]
    %v127 = vld [vmem:[#allocation5 + $0x4c] sm:$0xf]
    %v128 = vld [vmem:[#allocation5 + $0x50] sm:$0xf]
    %v129 = vld [vmem:[#allocation5 + $0x54] sm:$0xf]
    %v130 = vld [vmem:[#allocation5 + $0x58] sm:$0xf]
    %v131 = vld [vmem:[#allocation5 + $0x5c] sm:$0xf]
    %v132 = vld [vmem:[#allocation5 + $0x60] sm:$0xf]
    %v133 = vld [vmem:[#allocation5 + $0x64] sm:$0xf]
    %v134 = vld [vmem:[#allocation5 + $0x68] sm:$0xf]
    %v135 = vld [vmem:[#allocation5 + $0x6c] sm:$0xf]
    %v136 = vld [vmem:[#allocation5 + $0x70] sm:$0xf]
    %v137 = vld [vmem:[#allocation5 + $0x74] sm:$0xf]
    %v138 = vld [vmem:[#allocation5 + $0x78] sm:$0xf]
    %v139 = vld [vmem:[#allocation5 + $0x7c] sm:$0xf]
    %v140 = vld [vmem:[#allocation5 + $0x80] sm:$0xf]
    %v141 = vld [vmem:[#allocation5 + $0x84] sm:$0xf]
    %v142 = vld [vmem:[#allocation5 + $0x88] sm:$0xf]
    %v143 = vld [vmem:[#allocation5 + $0x8c] sm:$0xf]
    %v144 = vld [vmem:[#allocation5 + $0x90] sm:$0xf]
    %v145 = vld [vmem:[#allocation5 + $0x94] sm:$0xf]
    %v146 = vld [vmem:[#allocation5 + $0x98] sm:$0xf]
    %v147 = vld [vmem:[#allocation5 + $0x9c] sm:$0xf]
    %v148 = vld [vmem:[#allocation5 + $0xa0] sm:$0xf]
    %v149 = vld [vmem:[#allocation5 + $0xa4] sm:$0xf]
    %v150 = vld [vmem:[#allocation5 + $0xa8] sm:$0xf]
    %v151 = vld [vmem:[#allocation5 + $0xac] sm:$0xf]
    %v152 = vld [vmem:[#allocation5 + $0xb0] sm:$0xf]
    %v153 = vld [vmem:[#allocation5 + $0xb4] sm:$0xf]
    %v154 = vld [vmem:[#allocation5 + $0xb8] sm:$0xf]
    %v155 = vld [vmem:[#allocation5 + $0xbc] sm:$0xf]
    %v156 = vld [vmem:[#allocation5 + $0xc0] sm:$0xf]
    %v157 = vld [vmem:[#allocation5 + $0xc4] sm:$0xf]
    %v158 = vld [vmem:[#allocation5 + $0xc8] sm:$0xf]
    %v159 = vld [vmem:[#allocation5 + $0xcc] sm:$0xf]
    %v160 = vld [vmem:[#allocation5 + $0xd0] sm:$0xf]
    %v161 = vld [vmem:[#allocation5 + $0xd4] sm:$0xf]
    %v162 = vld [vmem:[#allocation5 + $0xd8] sm:$0xf]
    %v163 = vld [vmem:[#allocation5 + $0xdc] sm:$0xf]
    %v164 = vld [vmem:[#allocation5 + $0xe0] sm:$0xf]
    %v165 = vld [vmem:[#allocation5 + $0xe4] sm:$0xf]
    %v166 = vld [vmem:[#allocation5 + $0xe8] sm:$0xf]
    %v167 = vld [vmem:[#allocation5 + $0xec] sm:$0xf]
    %v168 = vld [vmem:[#allocation5 + $0xf0] sm:$0xf]
    %v169 = vld [vmem:[#allocation5 + $0xf4] sm:$0xf]
    %v170 = vld [vmem:[#allocation5 + $0xf8] sm:$0xf]
    %v171 = vld [vmem:[#allocation5 + $0xfc] sm:$0xf]
    %v172 = vld [vmem:[#allocation5 + $0x100] sm:$0xf]
    %v173 = vld [vmem:[#allocation5 + $0x104] sm:$0xf]
    %v174 = vld [vmem:[#allocation5 + $0x108] sm:$0xf]
    %v175 = vld [vmem:[#allocation5 + $0x10c] sm:$0xf]
    %v176 = vld [vmem:[#allocation5 + $0x110] sm:$0xf]
    %v177 = vld [vmem:[#allocation5 + $0x114] sm:$0xf]
    %v178 = vld [vmem:[#allocation5 + $0x118] sm:$0xf]
    %v179 = vld [vmem:[#allocation5 + $0x11c] sm:$0xf]
    %v180 = vld [vmem:[#allocation5 + $0x120] sm:$0xf]
    %v181 = vld [vmem:[#allocation5 + $0x124] sm:$0xf]
    %v182 = vld [vmem:[#allocation5 + $0x128] sm:$0xf]
    %v183 = vld [vmem:[#allocation5 + $0x12c] sm:$0xf]
    %v184 = vld [vmem:[#allocation5 + $0x130] sm:$0xf]
    %v185 = vld [vmem:[#allocation5 + $0x134] sm:$0xf]
    %v186 = vld [vmem:[#allocation5 + $0x138] sm:$0xf]
    %v187 = vld [vmem:[#allocation5 + $0x13c] sm:$0xf]
    %v188 = vld [vmem:[#allocation5 + $0x140] sm:$0xf]
    %v189 = vld [vmem:[#allocation5 + $0x144] sm:$0xf]
    %v190 = vld [vmem:[#allocation5 + $0x148] sm:$0xf]
    %v191 = vld [vmem:[#allocation5 + $0x14c] sm:$0xf]
    %v192 = vld [vmem:[#allocation5 + $0x150] sm:$0xf]
    %v193 = vld [vmem:[#allocation5 + $0x154] sm:$0xf]
    %v194 = vld [vmem:[#allocation5 + $0x158] sm:$0xf]
    %v195 = vld [vmem:[#allocation5 + $0x15c] sm:$0xf]
    %v196 = vld [vmem:[#allocation5 + $0x160] sm:$0xf]
    %v197 = vld [vmem:[#allocation5 + $0x164] sm:$0xf]
    %v198 = vld [vmem:[#allocation5 + $0x168] sm:$0xf]
    %v199 = vld [vmem:[#allocation5 + $0x16c] sm:$0xf]
    %v200 = vld [vmem:[#allocation5 + $0x170] sm:$0xf]
    %v201 = vld [vmem:[#allocation5 + $0x174] sm:$0xf]
    %v202 = vld [vmem:[#allocation5 + $0x178] sm:$0xf]
    %v203 = vld [vmem:[#allocation5 + $0x17c] sm:$0xf]
    %v204 = vld [vmem:[#allocation5 + $0x180] sm:$0xf]
    %v205 = vld [vmem:[#allocation5 + $0x184] sm:$0xf]
    %v206 = vld [vmem:[#allocation5 + $0x188] sm:$0xf]
    %v207 = vld [vmem:[#allocation5 + $0x18c] sm:$0xf]
    %v208 = vld [vmem:[#allocation5 + $0x190] sm:$0xf]
    %v209 = vld [vmem:[#allocation5 + $0x194] sm:$0xf]
    %v210 = vld [vmem:[#allocation5 + $0x198] sm:$0xf]
    %v211 = vld [vmem:[#allocation5 + $0x19c] sm:$0xf]
    %v212 = vld [vmem:[#allocation5 + $0x1a0] sm:$0xf]
    %v213 = vld [vmem:[#allocation5 + $0x1a4] sm:$0xf]
    %v214 = vld [vmem:[#allocation5 + $0x1a8] sm:$0xf]
    %v215 = vld [vmem:[#allocation5 + $0x1ac] sm:$0xf]
    %v216 = vld [vmem:[#allocation5 + $0x1b0] sm:$0xf]
    %v217 = vld [vmem:[#allocation5 + $0x1b4] sm:$0xf]
    %v218 = vld [vmem:[#allocation5 + $0x1b8] sm:$0xf]
    %v219 = vld [vmem:[#allocation5 + $0x1bc] sm:$0xf]
    %v220 = vld [vmem:[#allocation5 + $0x1c0] sm:$0xf]
    %v221 = vld [vmem:[#allocation5 + $0x1c4] sm:$0xf]
    %v222 = vld [vmem:[#allocation5 + $0x1c8] sm:$0xf]
    %v223 = vld [vmem:[#allocation5 + $0x1cc] sm:$0xf]
    %v224 = vld [vmem:[#allocation5 + $0x1d0] sm:$0xf]
    %v225 = vld [vmem:[#allocation5 + $0x1d4] sm:$0xf]
    %v226 = vld [vmem:[#allocation5 + $0x1d8] sm:$0xf]
    %v227 = vld [vmem:[#allocation5 + $0x1dc] sm:$0xf]
    %v228 = vld [vmem:[#allocation5 + $0x1e0] sm:$0xf]
    %v229 = vld [vmem:[#allocation5 + $0x1e4] sm:$0xf]
    %v230 = vld [vmem:[#allocation5 + $0x1e8] sm:$0xf]
    %v231 = vld [vmem:[#allocation5 + $0x1ec] sm:$0xf]
    %v232 = vld [vmem:[#allocation5 + $0x1f0] sm:$0xf]
    %v233 = vld [vmem:[#allocation5 + $0x1f4] sm:$0xf]
    %v234 = vld [vmem:[#allocation5 + $0x1f8] sm:$0xf]
    %v235 = vld [vmem:[#allocation5 + $0x1fc] sm:$0xf]
    %v236 = vld [vmem:[#allocation5 + $0x200] sm:$0xf]
    %v237 = vld [vmem:[#allocation5 + $0x204] sm:$0xf]
    %v238 = vld [vmem:[#allocation5 + $0x208] sm:$0xf]
    %v239 = vld [vmem:[#allocation5 + $0x20c] sm:$0xf]
    %v240 = vld [vmem:[#allocation5 + $0x210] sm:$0xf]
    %v241 = vld [vmem:[#allocation5 + $0x214] sm:$0xf]
    %v242 = vld [vmem:[#allocation5 + $0x218] sm:$0xf]
    %v243 = vld [vmem:[#allocation5 + $0x21c] sm:$0xf]
    %v244 = vld [vmem:[#allocation5 + $0x220] sm:$0xf]
    %v245 = vld [vmem:[#allocation5 + $0x224] sm:$0xf]
    %v246 = vld [vmem:[#allocation5 + $0x228] sm:$0xf]
    %v247 = vld [vmem:[#allocation5 + $0x22c] sm:$0xf]
    %v248 = vld [vmem:[#allocation5 + $0x230] sm:$0xf]
    %v249 = vld [vmem:[#allocation5 + $0x234] sm:$0xf]
    %v250 = vld [vmem:[#allocation5 + $0x238] sm:$0xf]
    %v251 = vld [vmem:[#allocation5 + $0x23c] sm:$0xf]
    %v252 = vld [vmem:[#allocation5 + $0x240] sm:$0xf]
    %v253 = vld [vmem:[#allocation5 + $0x244] sm:$0xf]
    %v254 = vld [vmem:[#allocation5 + $0x248] sm:$0xf]
    %v255 = vld [vmem:[#allocation5 + $0x24c] sm:$0xf]
    %v256 = vld [vmem:[#allocation5 + $0x250] sm:$0xf]
    %v257 = vld [vmem:[#allocation5 + $0x254] sm:$0xf]
    %v258 = vld [vmem:[#allocation5 + $0x258] sm:$0xf]
    %v259 = vld [vmem:[#allocation5 + $0x25c] sm:$0xf]
    %v260 = vld [vmem:[#allocation5 + $0x260] sm:$0xf]
    %v261 = vld [vmem:[#allocation5 + $0x264] sm:$0xf]
    %v262 = vld [vmem:[#allocation5 + $0x268] sm:$0xf]
    %v263 = vld [vmem:[#allocation5 + $0x26c] sm:$0xf]
    %v264 = vld [vmem:[#allocation5 + $0x270] sm:$0xf]
    %v265 = vld [vmem:[#allocation5 + $0x274] sm:$0xf]
    %v266 = vld [vmem:[#allocation5 + $0x278] sm:$0xf]
    %v267 = vld [vmem:[#allocation5 + $0x27c] sm:$0xf]
    %v268 = vld [vmem:[#allocation5 + $0x280] sm:$0xf]
    %v269 = vld [vmem:[#allocation5 + $0x284] sm:$0xf]
    %v270 = vld [vmem:[#allocation5 + $0x288] sm:$0xf]
    %v271 = vld [vmem:[#allocation5 + $0x28c] sm:$0xf]
    %v272 = vld [vmem:[#allocation5 + $0x290] sm:$0xf]
    %v273 = vld [vmem:[#allocation5 + $0x294] sm:$0xf]
    %v274 = vld [vmem:[#allocation5 + $0x298] sm:$0xf]
    %v275 = vld [vmem:[#allocation5 + $0x29c] sm:$0xf]
    %v276 = vld [vmem:[#allocation5 + $0x2a0] sm:$0xf]
    %v277 = vld [vmem:[#allocation5 + $0x2a4] sm:$0xf]
    %v278 = vld [vmem:[#allocation5 + $0x2a8] sm:$0xf]
    %v279 = vld [vmem:[#allocation5 + $0x2ac] sm:$0xf]
    %v280 = vld [vmem:[#allocation5 + $0x2b0] sm:$0xf]
    %v281 = vld [vmem:[#allocation5 + $0x2b4] sm:$0xf]
    %v282 = vld [vmem:[#allocation5 + $0x2b8] sm:$0xf]
    %v283 = vld [vmem:[#allocation5 + $0x2bc] sm:$0xf]
    %v284 = vld [vmem:[#allocation5 + $0x2c0] sm:$0xf]
    %v285 = vld [vmem:[#allocation5 + $0x2c4] sm:$0xf]
    %v286 = vld [vmem:[#allocation5 + $0x2c8] sm:$0xf]
    %v287 = vld [vmem:[#allocation5 + $0x2cc] sm:$0xf]
    %v288 = vld [vmem:[#allocation5 + $0x2d0] sm:$0xf]
    %v289 = vld [vmem:[#allocation5 + $0x2d4] sm:$0xf]
    %v290 = vld [vmem:[#allocation5 + $0x2d8] sm:$0xf]
    %v291 = vld [vmem:[#allocation5 + $0x2dc] sm:$0xf]
    %v292 = vld [vmem:[#allocation5 + $0x2e0] sm:$0xf]
    %v293 = vld [vmem:[#allocation5 + $0x2e4] sm:$0xf]
    %v294 = vld [vmem:[#allocation5 + $0x2e8] sm:$0xf]
    %v295 = vld [vmem:[#allocation5 + $0x2ec] sm:$0xf]
    %v296 = vld [vmem:[#allocation5 + $0x2f0] sm:$0xf]
    %v297 = vld [vmem:[#allocation5 + $0x2f4] sm:$0xf]
    %v298 = vld [vmem:[#allocation5 + $0x2f8] sm:$0xf]
    %v299 = vld [vmem:[#allocation5 + $0x2fc] sm:$0xf]
    %v300 = vld [vmem:[#allocation5 + $0x300] sm:$0xf]
    %v301 = vld [vmem:[#allocation5 + $0x304] sm:$0xf]
    %v302 = vld [vmem:[#allocation5 + $0x308] sm:$0xf]
    %v303 = vld [vmem:[#allocation5 + $0x30c] sm:$0xf]
    %v304 = vld [vmem:[#allocation5 + $0x310] sm:$0xf]
    %v305 = vld [vmem:[#allocation5 + $0x314] sm:$0xf]
    %v306 = vld [vmem:[#allocation5 + $0x318] sm:$0xf]
    %v307 = vld [vmem:[#allocation5 + $0x31c] sm:$0xf]
    %v308 = vld [vmem:[#allocation5 + $0x320] sm:$0xf]
    %v309 = vld [vmem:[#allocation5 + $0x324] sm:$0xf]
    %v310 = vld [vmem:[#allocation5 + $0x328] sm:$0xf]
    %v311 = vld [vmem:[#allocation5 + $0x32c] sm:$0xf]
    %v312 = vld [vmem:[#allocation5 + $0x330] sm:$0xf]
    %v313 = vld [vmem:[#allocation5 + $0x334] sm:$0xf]
    %v314 = vld [vmem:[#allocation5 + $0x338] sm:$0xf]
    %v315 = vld [vmem:[#allocation5 + $0x33c] sm:$0xf]
    %v316 = vld [vmem:[#allocation5 + $0x340] sm:$0xf]
    %v317 = vld [vmem:[#allocation5 + $0x344] sm:$0xf]
    %v318 = vld [vmem:[#allocation5 + $0x348] sm:$0xf]
    %v319 = vld [vmem:[#allocation5 + $0x34c] sm:$0xf]
    %v320 = vld [vmem:[#allocation5 + $0x350] sm:$0xf]
    %v321 = vld [vmem:[#allocation5 + $0x354] sm:$0xf]
    %v322 = vld [vmem:[#allocation5 + $0x358] sm:$0xf]
    %v323 = vld [vmem:[#allocation5 + $0x35c] sm:$0xf]
    %v324 = vld [vmem:[#allocation5 + $0x360] sm:$0xf]
    %v325 = vld [vmem:[#allocation5 + $0x364] sm:$0xf]
    %v326 = vld [vmem:[#allocation5 + $0x368] sm:$0xf]
    %v327 = vld [vmem:[#allocation5 + $0x36c] sm:$0xf]
    %v328 = vld [vmem:[#allocation5 + $0x370] sm:$0xf]
    %v329 = vld [vmem:[#allocation5 + $0x374] sm:$0xf]
    %v330 = vld [vmem:[#allocation5 + $0x378] sm:$0xf]
    %v331 = vld [vmem:[#allocation5 + $0x37c] sm:$0xf]
    %v332 = vld [vmem:[#allocation5 + $0x380] sm:$0xf]
    %v333 = vld [vmem:[#allocation5 + $0x384] sm:$0xf]
    %v334 = vld [vmem:[#allocation5 + $0x388] sm:$0xf]
    %v335 = vld [vmem:[#allocation5 + $0x38c] sm:$0xf]
    %v336 = vld [vmem:[#allocation5 + $0x390] sm:$0xf]
    %v337 = vld [vmem:[#allocation5 + $0x394] sm:$0xf]
    %v338 = vld [vmem:[#allocation5 + $0x398] sm:$0xf]
    %v339 = vld [vmem:[#allocation5 + $0x39c] sm:$0xf]
    %v340 = vld [vmem:[#allocation5 + $0x3a0] sm:$0xf]
    %v341 = vld [vmem:[#allocation5 + $0x3a4] sm:$0xf]
    %v342 = vld [vmem:[#allocation5 + $0x3a8] sm:$0xf]
    %v343 = vld [vmem:[#allocation5 + $0x3ac] sm:$0xf]
    %v344 = vld [vmem:[#allocation5 + $0x3b0] sm:$0xf]
    %v345 = vld [vmem:[#allocation5 + $0x3b4] sm:$0xf]
    %v346 = vld [vmem:[#allocation5 + $0x3b8] sm:$0xf]
    %v347 = vld [vmem:[#allocation5 + $0x3bc] sm:$0xf]
    %v348 = vld [vmem:[#allocation5 + $0x3c0] sm:$0xf]
    %v349 = vld [vmem:[#allocation5 + $0x3c4] sm:$0xf]
    %v350 = vld [vmem:[#allocation5 + $0x3c8] sm:$0xf]
    %v351 = vld [vmem:[#allocation5 + $0x3cc] sm:$0xf]
    %v352 = vld [vmem:[#allocation5 + $0x3d0] sm:$0xf]
    %v353 = vld [vmem:[#allocation5 + $0x3d4] sm:$0xf]
    %v354 = vld [vmem:[#allocation5 + $0x3d8] sm:$0xf]
    %v355 = vld [vmem:[#allocation5 + $0x3dc] sm:$0xf]
    %v356 = vld [vmem:[#allocation5 + $0x3e0] sm:$0xf]
    %v357 = vld [vmem:[#allocation5 + $0x3e4] sm:$0xf]
    %v358 = vld [vmem:[#allocation5 + $0x3e8] sm:$0xf]
    %v359 = vld [vmem:[#allocation5 + $0x3ec] sm:$0xf]
    %v360 = vld [vmem:[#allocation5 + $0x3f0] sm:$0xf]
    %v361 = vld [vmem:[#allocation5 + $0x3f4] sm:$0xf]
    %v362 = vld [vmem:[#allocation5 + $0x3f8] sm:$0xf]
    %v363 = vld [vmem:[#allocation5 + $0x3fc] sm:$0xf]
    %v364 = vld [vmem:[#allocation5 + $0x400] sm:$0xf]
    %v365 = vld [vmem:[#allocation5 + $0x404] sm:$0xf]
    %v366 = vld [vmem:[#allocation5 + $0x408] sm:$0xf]
    %v367 = vld [vmem:[#allocation5 + $0x40c] sm:$0xf]
    %v368 = vld [vmem:[#allocation5 + $0x410] sm:$0xf]
    %v369 = vld [vmem:[#allocation5 + $0x414] sm:$0xf]
    %v370 = vld [vmem:[#allocation5 + $0x418] sm:$0xf]
    %v371 = vld [vmem:[#allocation5 + $0x41c] sm:$0xf]
    %v372 = vld [vmem:[#allocation5 + $0x420] sm:$0xf]
    %v373 = vld [vmem:[#allocation5 + $0x424] sm:$0xf]
    %v374 = vld [vmem:[#allocation5 + $0x428] sm:$0xf]
    %v375 = vld [vmem:[#allocation5 + $0x42c] sm:$0xf]
    %v376 = vld [vmem:[#allocation5 + $0x430] sm:$0xf]
    %v377 = vld [vmem:[#allocation5 + $0x434] sm:$0xf]
    %v378 = vld [vmem:[#allocation5 + $0x438] sm:$0xf]
    %v379 = vld [vmem:[#allocation5 + $0x43c] sm:$0xf]
    %v380 = vld [vmem:[#allocation5 + $0x440] sm:$0xf]
    %v381 = vld [vmem:[#allocation5 + $0x444] sm:$0xf]
    %v382 = vld [vmem:[#allocation5 + $0x448] sm:$0xf]
    %v383 = vld [vmem:[#allocation5 + $0x44c] sm:$0xf]
    %v384 = vld [vmem:[#allocation5 + $0x450] sm:$0xf]
    %v385 = vld [vmem:[#allocation5 + $0x454] sm:$0xf]
    %v386 = vld [vmem:[#allocation5 + $0x458] sm:$0xf]
    %v387 = vld [vmem:[#allocation5 + $0x45c] sm:$0xf]
    %v388 = vld [vmem:[#allocation5 + $0x460] sm:$0xf]
    %v389 = vld [vmem:[#allocation5 + $0x464] sm:$0xf]
    %v390 = vld [vmem:[#allocation5 + $0x468] sm:$0xf]
    %v391 = vld [vmem:[#allocation5 + $0x46c] sm:$0xf]
    %v392 = vld [vmem:[#allocation5 + $0x470] sm:$0xf]
    %v393 = vld [vmem:[#allocation5 + $0x474] sm:$0xf]
    %v394 = vld [vmem:[#allocation5 + $0x478] sm:$0xf]
    %v395 = vld [vmem:[#allocation5 + $0x47c] sm:$0xf]
    %v396 = vld [vmem:[#allocation5 + $0x480] sm:$0xf]
    %v397 = vld [vmem:[#allocation5 + $0x484] sm:$0xf]
    %v398 = vld [vmem:[#allocation5 + $0x488] sm:$0xf]
    %v399 = vld [vmem:[#allocation5 + $0x48c] sm:$0xf]
    %v400 = vld [vmem:[#allocation5 + $0x490] sm:$0xf]
    %v401 = vld [vmem:[#allocation5 + $0x494] sm:$0xf]
    %v402 = vld [vmem:[#allocation5 + $0x498] sm:$0xf]
    %v403 = vld [vmem:[#allocation5 + $0x49c] sm:$0xf]
    %v404 = vld [vmem:[#allocation5 + $0x4a0] sm:$0xf]
    %v405 = vld [vmem:[#allocation5 + $0x4a4] sm:$0xf]
    %v406 = vld [vmem:[#allocation5 + $0x4a8] sm:$0xf]
    %v407 = vld [vmem:[#allocation5 + $0x4ac] sm:$0xf]
    %v408 = vld [vmem:[#allocation5 + $0x4b0] sm:$0xf]
    %v409 = vld [vmem:[#allocation5 + $0x4b4] sm:$0xf]
    %v410 = vld [vmem:[#allocation5 + $0x4b8] sm:$0xf]
    %v411 = vld [vmem:[#allocation5 + $0x4bc] sm:$0xf]
    %v412 = vld [vmem:[#allocation5 + $0x4c0] sm:$0xf]
    %v413 = vld [vmem:[#allocation5 + $0x4c4] sm:$0xf]
    %v414 = vld [vmem:[#allocation5 + $0x4c8] sm:$0xf]
    %v415 = vld [vmem:[#allocation5 + $0x4cc] sm:$0xf]
    %v416 = vld [vmem:[#allocation5 + $0x4d0] sm:$0xf]
    %v417 = vld [vmem:[#allocation5 + $0x4d4] sm:$0xf]
    %v418 = vld [vmem:[#allocation5 + $0x4d8] sm:$0xf]
    %v419 = vld [vmem:[#allocation5 + $0x4dc] sm:$0xf]
    %v420 = vld [vmem:[#allocation5 + $0x4e0] sm:$0xf]
    %v421 = vld [vmem:[#allocation5 + $0x4e4] sm:$0xf]
    %v422 = vld [vmem:[#allocation5 + $0x4e8] sm:$0xf]
    %v423 = vld [vmem:[#allocation5 + $0x4ec] sm:$0xf]
    %v424 = vld [vmem:[#allocation5 + $0x4f0] sm:$0xf]
    %v425 = vld [vmem:[#allocation5 + $0x4f4] sm:$0xf]
    %v426 = vld [vmem:[#allocation5 + $0x4f8] sm:$0xf]
    %v427 = vld [vmem:[#allocation5 + $0x4fc] sm:$0xf]
    %v428 = vld [vmem:[#allocation5 + $0x500] sm:$0xf]
    %v429 = vld [vmem:[#allocation5 + $0x504] sm:$0xf]
    %v430 = vld [vmem:[#allocation5 + $0x508] sm:$0xf]
    %v431 = vld [vmem:[#allocation5 + $0x50c] sm:$0xf]
    %v432 = vld [vmem:[#allocation5 + $0x510] sm:$0xf]
    %v433 = vld [vmem:[#allocation5 + $0x514] sm:$0xf]
    %v434 = vld [vmem:[#allocation5 + $0x518] sm:$0xf]
    %v435 = vld [vmem:[#allocation5 + $0x51c] sm:$0xf]
    %v436 = vld [vmem:[#allocation5 + $0x520] sm:$0xf]
    %v437 = vld [vmem:[#allocation5 + $0x524] sm:$0xf]
    %v438 = vld [vmem:[#allocation5 + $0x528] sm:$0xf]
    %v439 = vld [vmem:[#allocation5 + $0x52c] sm:$0xf]
    %v440 = vld [vmem:[#allocation5 + $0x530] sm:$0xf]
    %v441 = vld [vmem:[#allocation5 + $0x534] sm:$0xf]
    %v442 = vld [vmem:[#allocation5 + $0x538] sm:$0xf]
    %v443 = vld [vmem:[#allocation5 + $0x53c] sm:$0xf]
    %v444 = vld [vmem:[#allocation5 + $0x540] sm:$0xf]
    %v445 = vld [vmem:[#allocation5 + $0x544] sm:$0xf]
    %v446 = vld [vmem:[#allocation5 + $0x548] sm:$0xf]
    %v447 = vld [vmem:[#allocation5 + $0x54c] sm:$0xf]
    %v448 = vld [vmem:[#allocation5 + $0x550] sm:$0xf]
    %v449 = vld [vmem:[#allocation5 + $0x554] sm:$0xf]
    %v450 = vld [vmem:[#allocation5 + $0x558] sm:$0xf]
    %v451 = vld [vmem:[#allocation5 + $0x55c] sm:$0xf]
    %v452 = vld [vmem:[#allocation5 + $0x560] sm:$0xf]
    %v453 = vld [vmem:[#allocation5 + $0x564] sm:$0xf]
    %v454 = vld [vmem:[#allocation5 + $0x568] sm:$0xf]
    %v455 = vld [vmem:[#allocation5 + $0x56c] sm:$0xf]
    %v456 = vld [vmem:[#allocation5 + $0x570] sm:$0xf]
    %v457 = vld [vmem:[#allocation5 + $0x574] sm:$0xf]
    %v458 = vld [vmem:[#allocation5 + $0x578] sm:$0xf]
    %v459 = vld [vmem:[#allocation5 + $0x57c] sm:$0xf]
    %v460 = vld [vmem:[#allocation5 + $0x580] sm:$0xf]
    %v461 = vld [vmem:[#allocation5 + $0x584] sm:$0xf]
    %v462 = vld [vmem:[#allocation5 + $0x588] sm:$0xf]
    %v463 = vld [vmem:[#allocation5 + $0x58c] sm:$0xf]
    %v464 = vld [vmem:[#allocation5 + $0x590] sm:$0xf]
    %v465 = vld [vmem:[#allocation5 + $0x594] sm:$0xf]
    %v466 = vld [vmem:[#allocation5 + $0x598] sm:$0xf]
    %v467 = vld [vmem:[#allocation5 + $0x59c] sm:$0xf]
    %v468 = vld [vmem:[#allocation5 + $0x5a0] sm:$0xf]
    %v469 = vld [vmem:[#allocation5 + $0x5a4] sm:$0xf]
    %v470 = vld [vmem:[#allocation5 + $0x5a8] sm:$0xf]
    %v471 = vld [vmem:[#allocation5 + $0x5ac] sm:$0xf]
    %v472 = vld [vmem:[#allocation5 + $0x5b0] sm:$0xf]
    %v473 = vld [vmem:[#allocation5 + $0x5b4] sm:$0xf]
    %v474 = vld [vmem:[#allocation5 + $0x5b8] sm:$0xf]
    %v475 = vld [vmem:[#allocation5 + $0x5bc] sm:$0xf]
    %v476 = vld [vmem:[#allocation5 + $0x5c0] sm:$0xf]
    %v477 = vld [vmem:[#allocation5 + $0x5c4] sm:$0xf]
    %v478 = vld [vmem:[#allocation5 + $0x5c8] sm:$0xf]
    %v479 = vld [vmem:[#allocation5 + $0x5cc] sm:$0xf]
    %v480 = vld [vmem:[#allocation5 + $0x5d0] sm:$0xf]
    %v481 = vld [vmem:[#allocation5 + $0x5d4] sm:$0xf]
    %v482 = vld [vmem:[#allocation5 + $0x5d8] sm:$0xf]
    %v483 = vld [vmem:[#allocation5 + $0x5dc] sm:$0xf]
    %v484 = vld [vmem:[#allocation5 + $0x5e0] sm:$0xf]
    %v485 = vld [vmem:[#allocation5 + $0x5e4] sm:$0xf]
    %v486 = vld [vmem:[#allocation5 + $0x5e8] sm:$0xf]
    %v487 = vld [vmem:[#allocation5 + $0x5ec] sm:$0xf]
    %v488 = vld [vmem:[#allocation5 + $0x5f0] sm:$0xf]
    %v489 = vld [vmem:[#allocation5 + $0x5f4] sm:$0xf]
    %v490 = vld [vmem:[#allocation5 + $0x5f8] sm:$0xf]
    %v491 = vld [vmem:[#allocation5 + $0x5fc] sm:$0xf]
    %v492 = vld [vmem:[%s2] sm:$0x1]
    %v494 = vlaneseq
    %v495 = vshrl.u32 %v494, 7
    %v496 = vsub.s32 0, %v495
    %v497 = vrot.slane %v492, %v496
    %v883 = vunpack.c.l.b16 %v108
    %v884 = vunpack.c.l.b16 %v109
    %v885 = vunpack.c.l.b16 %v110
    %v886 = vunpack.c.l.b16 %v111
    %v887 = vunpack.c.l.b16 %v112
    %v888 = vunpack.c.l.b16 %v113
    %v889 = vunpack.c.l.b16 %v114
    %v890 = vunpack.c.l.b16 %v115
    %v891 = vunpack.c.l.b16 %v116
    %v892 = vunpack.c.l.b16 %v117
    %v893 = vunpack.c.l.b16 %v118
    %v894 = vunpack.c.l.b16 %v119
    %v895 = vunpack.c.l.b16 %v120
    %v896 = vunpack.c.l.b16 %v121
    %v897 = vunpack.c.l.b16 %v122
    %v898 = vunpack.c.l.b16 %v123
    %v899 = vunpack.c.l.b16 %v124
    %v900 = vunpack.c.l.b16 %v125
    %v901 = vunpack.c.l.b16 %v126
    %v902 = vunpack.c.l.b16 %v127
    %v903 = vunpack.c.l.b16 %v128
    %v904 = vunpack.c.l.b16 %v129
    %v905 = vunpack.c.l.b16 %v130
    %v906 = vunpack.c.l.b16 %v131
    %v907 = vunpack.c.l.b16 %v132
    %v908 = vunpack.c.l.b16 %v133
    %v909 = vunpack.c.l.b16 %v134
    %v910 = vunpack.c.l.b16 %v135
    %v911 = vunpack.c.l.b16 %v136
    %v912 = vunpack.c.l.b16 %v137
    %v913 = vunpack.c.l.b16 %v138
    %v914 = vunpack.c.l.b16 %v139
    %v915 = vunpack.c.l.b16 %v140
    %v916 = vunpack.c.l.b16 %v141
    %v917 = vunpack.c.l.b16 %v142
    %v918 = vunpack.c.l.b16 %v143
    %v919 = vunpack.c.l.b16 %v144
    %v920 = vunpack.c.l.b16 %v145
    %v921 = vunpack.c.l.b16 %v146
    %v922 = vunpack.c.l.b16 %v147
    %v923 = vunpack.c.l.b16 %v148
    %v924 = vunpack.c.l.b16 %v149
    %v925 = vunpack.c.l.b16 %v150
    %v926 = vunpack.c.l.b16 %v151
    %v927 = vunpack.c.l.b16 %v152
    %v928 = vunpack.c.l.b16 %v153
    %v929 = vunpack.c.l.b16 %v154
    %v930 = vunpack.c.l.b16 %v155
    %v931 = vunpack.c.l.b16 %v156
    %v932 = vunpack.c.l.b16 %v157
    %v933 = vunpack.c.l.b16 %v158
    %v934 = vunpack.c.l.b16 %v159
    %v935 = vunpack.c.l.b16 %v160
    %v936 = vunpack.c.l.b16 %v161
    %v937 = vunpack.c.l.b16 %v162
    %v938 = vunpack.c.l.b16 %v163
    %v939 = vunpack.c.l.b16 %v164
    %v940 = vunpack.c.l.b16 %v165
    %v941 = vunpack.c.l.b16 %v166
    %v942 = vunpack.c.l.b16 %v167
    %v943 = vunpack.c.l.b16 %v168
    %v944 = vunpack.c.l.b16 %v169
    %v945 = vunpack.c.l.b16 %v170
    %v946 = vunpack.c.l.b16 %v171
    %v947 = vunpack.c.l.b16 %v172
    %v948 = vunpack.c.l.b16 %v173
    %v949 = vunpack.c.l.b16 %v174
    %v950 = vunpack.c.l.b16 %v175
    %v951 = vunpack.c.l.b16 %v176
    %v952 = vunpack.c.l.b16 %v177
    %v953 = vunpack.c.l.b16 %v178
    %v954 = vunpack.c.l.b16 %v179
    %v955 = vunpack.c.l.b16 %v180
    %v956 = vunpack.c.l.b16 %v181
    %v957 = vunpack.c.l.b16 %v182
    %v958 = vunpack.c.l.b16 %v183
    %v959 = vunpack.c.l.b16 %v184
    %v960 = vunpack.c.l.b16 %v185
    %v961 = vunpack.c.l.b16 %v186
    %v962 = vunpack.c.l.b16 %v187
    %v963 = vunpack.c.l.b16 %v188
    %v964 = vunpack.c.l.b16 %v189
    %v965 = vunpack.c.l.b16 %v190
    %v966 = vunpack.c.l.b16 %v191
    %v967 = vunpack.c.l.b16 %v192
    %v968 = vunpack.c.l.b16 %v193
    %v969 = vunpack.c.l.b16 %v194
    %v970 = vunpack.c.l.b16 %v195
    %v971 = vunpack.c.l.b16 %v196
    %v972 = vunpack.c.l.b16 %v197
    %v973 = vunpack.c.l.b16 %v198
    %v974 = vunpack.c.l.b16 %v199
    %v975 = vunpack.c.l.b16 %v200
    %v976 = vunpack.c.l.b16 %v201
    %v977 = vunpack.c.l.b16 %v202
    %v978 = vunpack.c.l.b16 %v203
    %v979 = vunpack.c.l.b16 %v204
    %v980 = vunpack.c.l.b16 %v205
    %v981 = vunpack.c.l.b16 %v206
    %v982 = vunpack.c.l.b16 %v207
    %v983 = vunpack.c.l.b16 %v208
    %v984 = vunpack.c.l.b16 %v209
    %v985 = vunpack.c.l.b16 %v210
    %v986 = vunpack.c.l.b16 %v211
    %v987 = vunpack.c.l.b16 %v212
    %v988 = vunpack.c.l.b16 %v213
    %v989 = vunpack.c.l.b16 %v214
    %v990 = vunpack.c.l.b16 %v215
    %v991 = vunpack.c.l.b16 %v216
    %v992 = vunpack.c.l.b16 %v217
    %v993 = vunpack.c.l.b16 %v218
    %v994 = vunpack.c.l.b16 %v219
    %v995 = vunpack.c.l.b16 %v220
    %v996 = vunpack.c.l.b16 %v221
    %v997 = vunpack.c.l.b16 %v222
    %v998 = vunpack.c.l.b16 %v223
    %v999 = vunpack.c.l.b16 %v224
    %v1000 = vunpack.c.l.b16 %v225
    %v1001 = vunpack.c.l.b16 %v226
    %v1002 = vunpack.c.l.b16 %v227
    %v1003 = vunpack.c.l.b16 %v228
    %v1004 = vunpack.c.l.b16 %v229
    %v1005 = vunpack.c.l.b16 %v230
    %v1006 = vunpack.c.l.b16 %v231
    %v1007 = vunpack.c.l.b16 %v232
    %v1008 = vunpack.c.l.b16 %v233
    %v1009 = vunpack.c.l.b16 %v234
    %v1010 = vunpack.c.l.b16 %v235
    %v1011 = vunpack.c.l.b16 %v236
    %v1012 = vunpack.c.l.b16 %v237
    %v1013 = vunpack.c.l.b16 %v238
    %v1014 = vunpack.c.l.b16 %v239
    %v1015 = vunpack.c.l.b16 %v240
    %v1016 = vunpack.c.l.b16 %v241
    %v1017 = vunpack.c.l.b16 %v242
    %v1018 = vunpack.c.l.b16 %v243
    %v1019 = vunpack.c.l.b16 %v244
    %v1020 = vunpack.c.l.b16 %v245
    %v1021 = vunpack.c.l.b16 %v246
    %v1022 = vunpack.c.l.b16 %v247
    %v1023 = vunpack.c.l.b16 %v248
    %v1024 = vunpack.c.l.b16 %v249
    %v1025 = vunpack.c.l.b16 %v250
    %v1026 = vunpack.c.l.b16 %v251
    %v1027 = vunpack.c.l.b16 %v252
    %v1028 = vunpack.c.l.b16 %v253
    %v1029 = vunpack.c.l.b16 %v254
    %v1030 = vunpack.c.l.b16 %v255
    %v1031 = vunpack.c.l.b16 %v256
    %v1032 = vunpack.c.l.b16 %v257
    %v1033 = vunpack.c.l.b16 %v258
    %v1034 = vunpack.c.l.b16 %v259
    %v1035 = vunpack.c.l.b16 %v260
    %v1036 = vunpack.c.l.b16 %v261
    %v1037 = vunpack.c.l.b16 %v262
    %v1038 = vunpack.c.l.b16 %v263
    %v1039 = vunpack.c.l.b16 %v264
    %v1040 = vunpack.c.l.b16 %v265
    %v1041 = vunpack.c.l.b16 %v266
    %v1042 = vunpack.c.l.b16 %v267
    %v1043 = vunpack.c.l.b16 %v268
    %v1044 = vunpack.c.l.b16 %v269
    %v1045 = vunpack.c.l.b16 %v270
    %v1046 = vunpack.c.l.b16 %v271
    %v1047 = vunpack.c.l.b16 %v272
    %v1048 = vunpack.c.l.b16 %v273
    %v1049 = vunpack.c.l.b16 %v274
    %v1050 = vunpack.c.l.b16 %v275
    %v1051 = vunpack.c.l.b16 %v276
    %v1052 = vunpack.c.l.b16 %v277
    %v1053 = vunpack.c.l.b16 %v278
    %v1054 = vunpack.c.l.b16 %v279
    %v1055 = vunpack.c.l.b16 %v280
    %v1056 = vunpack.c.l.b16 %v281
    %v1057 = vunpack.c.l.b16 %v282
    %v1058 = vunpack.c.l.b16 %v283
    %v1059 = vunpack.c.l.b16 %v284
    %v1060 = vunpack.c.l.b16 %v285
    %v1061 = vunpack.c.l.b16 %v286
    %v1062 = vunpack.c.l.b16 %v287
    %v1063 = vunpack.c.l.b16 %v288
    %v1064 = vunpack.c.l.b16 %v289
    %v1065 = vunpack.c.l.b16 %v290
    %v1066 = vunpack.c.l.b16 %v291
    %v1067 = vunpack.c.l.b16 %v292
    %v1068 = vunpack.c.l.b16 %v293
    %v1069 = vunpack.c.l.b16 %v294
    %v1070 = vunpack.c.l.b16 %v295
    %v1071 = vunpack.c.l.b16 %v296
    %v1072 = vunpack.c.l.b16 %v297
    %v1073 = vunpack.c.l.b16 %v298
    %v1074 = vunpack.c.l.b16 %v299
    %v1075 = vunpack.c.l.b16 %v300
    %v1076 = vunpack.c.l.b16 %v301
    %v1077 = vunpack.c.l.b16 %v302
    %v1078 = vunpack.c.l.b16 %v303
    %v1079 = vunpack.c.l.b16 %v304
    %v1080 = vunpack.c.l.b16 %v305
    %v1081 = vunpack.c.l.b16 %v306
    %v1082 = vunpack.c.l.b16 %v307
    %v1083 = vunpack.c.l.b16 %v308
    %v1084 = vunpack.c.l.b16 %v309
    %v1085 = vunpack.c.l.b16 %v310
    %v1086 = vunpack.c.l.b16 %v311
    %v1087 = vunpack.c.l.b16 %v312
    %v1088 = vunpack.c.l.b16 %v313
    %v1089 = vunpack.c.l.b16 %v314
    %v1090 = vunpack.c.l.b16 %v315
    %v1091 = vunpack.c.l.b16 %v316
    %v1092 = vunpack.c.l.b16 %v317
    %v1093 = vunpack.c.l.b16 %v318
    %v1094 = vunpack.c.l.b16 %v319
    %v1095 = vunpack.c.l.b16 %v320
    %v1096 = vunpack.c.l.b16 %v321
    %v1097 = vunpack.c.l.b16 %v322
    %v1098 = vunpack.c.l.b16 %v323
    %v1099 = vunpack.c.l.b16 %v324
    %v1100 = vunpack.c.l.b16 %v325
    %v1101 = vunpack.c.l.b16 %v326
    %v1102 = vunpack.c.l.b16 %v327
    %v1103 = vunpack.c.l.b16 %v328
    %v1104 = vunpack.c.l.b16 %v329
    %v1105 = vunpack.c.l.b16 %v330
    %v1106 = vunpack.c.l.b16 %v331
    %v1107 = vunpack.c.l.b16 %v332
    %v1108 = vunpack.c.l.b16 %v333
    %v1109 = vunpack.c.l.b16 %v334
    %v1110 = vunpack.c.l.b16 %v335
    %v1111 = vunpack.c.l.b16 %v336
    %v1112 = vunpack.c.l.b16 %v337
    %v1113 = vunpack.c.l.b16 %v338
    %v1114 = vunpack.c.l.b16 %v339
    %v1115 = vunpack.c.l.b16 %v340
    %v1116 = vunpack.c.l.b16 %v341
    %v1117 = vunpack.c.l.b16 %v342
    %v1118 = vunpack.c.l.b16 %v343
    %v1119 = vunpack.c.l.b16 %v344
    %v1120 = vunpack.c.l.b16 %v345
    %v1121 = vunpack.c.l.b16 %v346
    %v1122 = vunpack.c.l.b16 %v347
    %v1123 = vunpack.c.l.b16 %v348
    %v1124 = vunpack.c.l.b16 %v349
    %v1125 = vunpack.c.l.b16 %v350
    %v1126 = vunpack.c.l.b16 %v351
    %v1127 = vunpack.c.l.b16 %v352
    %v1128 = vunpack.c.l.b16 %v353
    %v1129 = vunpack.c.l.b16 %v354
    %v1130 = vunpack.c.l.b16 %v355
    %v1131 = vunpack.c.l.b16 %v356
    %v1132 = vunpack.c.l.b16 %v357
    %v1133 = vunpack.c.l.b16 %v358
    %v1134 = vunpack.c.l.b16 %v359
    %v1135 = vunpack.c.l.b16 %v360
    %v1136 = vunpack.c.l.b16 %v361
    %v1137 = vunpack.c.l.b16 %v362
    %v1138 = vunpack.c.l.b16 %v363
    %v1139 = vunpack.c.l.b16 %v364
    %v1140 = vunpack.c.l.b16 %v365
    %v1141 = vunpack.c.l.b16 %v366
    %v1142 = vunpack.c.l.b16 %v367
    %v1143 = vunpack.c.l.b16 %v368
    %v1144 = vunpack.c.l.b16 %v369
    %v1145 = vunpack.c.l.b16 %v370
    %v1146 = vunpack.c.l.b16 %v371
    %v1147 = vunpack.c.l.b16 %v372
    %v1148 = vunpack.c.l.b16 %v373
    %v1149 = vunpack.c.l.b16 %v374
    %v1150 = vunpack.c.l.b16 %v375
    %v1151 = vunpack.c.l.b16 %v376
    %v1152 = vunpack.c.l.b16 %v377
    %v1153 = vunpack.c.l.b16 %v378
    %v1154 = vunpack.c.l.b16 %v379
    %v1155 = vunpack.c.l.b16 %v380
    %v1156 = vunpack.c.l.b16 %v381
    %v1157 = vunpack.c.l.b16 %v382
    %v1158 = vunpack.c.l.b16 %v383
    %v1159 = vunpack.c.l.b16 %v384
    %v1160 = vunpack.c.l.b16 %v385
    %v1161 = vunpack.c.l.b16 %v386
    %v1162 = vunpack.c.l.b16 %v387
    %v1163 = vunpack.c.l.b16 %v388
    %v1164 = vunpack.c.l.b16 %v389
    %v1165 = vunpack.c.l.b16 %v390
    %v1166 = vunpack.c.l.b16 %v391
    %v1167 = vunpack.c.l.b16 %v392
    %v1168 = vunpack.c.l.b16 %v393
    %v1169 = vunpack.c.l.b16 %v394
    %v1170 = vunpack.c.l.b16 %v395
    %v1171 = vunpack.c.l.b16 %v396
    %v1172 = vunpack.c.l.b16 %v397
    %v1173 = vunpack.c.l.b16 %v398
    %v1174 = vunpack.c.l.b16 %v399
    %v1175 = vunpack.c.l.b16 %v400
    %v1176 = vunpack.c.l.b16 %v401
    %v1177 = vunpack.c.l.b16 %v402
    %v1178 = vunpack.c.l.b16 %v403
    %v1179 = vunpack.c.l.b16 %v404
    %v1180 = vunpack.c.l.b16 %v405
    %v1181 = vunpack.c.l.b16 %v406
    %v1182 = vunpack.c.l.b16 %v407
    %v1183 = vunpack.c.l.b16 %v408
    %v1184 = vunpack.c.l.b16 %v409
    %v1185 = vunpack.c.l.b16 %v410
    %v1186 = vunpack.c.l.b16 %v411
    %v1187 = vunpack.c.l.b16 %v412
    %v1188 = vunpack.c.l.b16 %v413
    %v1189 = vunpack.c.l.b16 %v414
    %v1190 = vunpack.c.l.b16 %v415
    %v1191 = vunpack.c.l.b16 %v416
    %v1192 = vunpack.c.l.b16 %v417
    %v1193 = vunpack.c.l.b16 %v418
    %v1194 = vunpack.c.l.b16 %v419
    %v1195 = vunpack.c.l.b16 %v420
    %v1196 = vunpack.c.l.b16 %v421
    %v1197 = vunpack.c.l.b16 %v422
    %v1198 = vunpack.c.l.b16 %v423
    %v1199 = vunpack.c.l.b16 %v424
    %v1200 = vunpack.c.l.b16 %v425
    %v1201 = vunpack.c.l.b16 %v426
    %v1202 = vunpack.c.l.b16 %v427
    %v1203 = vunpack.c.l.b16 %v428
    %v1204 = vunpack.c.l.b16 %v429
    %v1205 = vunpack.c.l.b16 %v430
    %v1206 = vunpack.c.l.b16 %v431
    %v1207 = vunpack.c.l.b16 %v432
    %v1208 = vunpack.c.l.b16 %v433
    %v1209 = vunpack.c.l.b16 %v434
    %v1210 = vunpack.c.l.b16 %v435
    %v1211 = vunpack.c.l.b16 %v436
    %v1212 = vunpack.c.l.b16 %v437
    %v1213 = vunpack.c.l.b16 %v438
    %v1214 = vunpack.c.l.b16 %v439
    %v1215 = vunpack.c.l.b16 %v440
    %v1216 = vunpack.c.l.b16 %v441
    %v1217 = vunpack.c.l.b16 %v442
    %v1218 = vunpack.c.l.b16 %v443
    %v1219 = vunpack.c.l.b16 %v444
    %v1220 = vunpack.c.l.b16 %v445
    %v1221 = vunpack.c.l.b16 %v446
    %v1222 = vunpack.c.l.b16 %v447
    %v1223 = vunpack.c.l.b16 %v448
    %v1224 = vunpack.c.l.b16 %v449
    %v1225 = vunpack.c.l.b16 %v450
    %v1226 = vunpack.c.l.b16 %v451
    %v1227 = vunpack.c.l.b16 %v452
    %v1228 = vunpack.c.l.b16 %v453
    %v1229 = vunpack.c.l.b16 %v454
    %v1230 = vunpack.c.l.b16 %v455
    %v1231 = vunpack.c.l.b16 %v456
    %v1232 = vunpack.c.l.b16 %v457
    %v1233 = vunpack.c.l.b16 %v458
    %v1234 = vunpack.c.l.b16 %v459
    %v1235 = vunpack.c.l.b16 %v460
    %v1236 = vunpack.c.l.b16 %v461
    %v1237 = vunpack.c.l.b16 %v462
    %v1238 = vunpack.c.l.b16 %v463
    %v1239 = vunpack.c.l.b16 %v464
    %v1240 = vunpack.c.l.b16 %v465
    %v1241 = vunpack.c.l.b16 %v466
    %v1242 = vunpack.c.l.b16 %v467
    %v1243 = vunpack.c.l.b16 %v468
    %v1244 = vunpack.c.l.b16 %v469
    %v1245 = vunpack.c.l.b16 %v470
    %v1246 = vunpack.c.l.b16 %v471
    %v1247 = vunpack.c.l.b16 %v472
    %v1248 = vunpack.c.l.b16 %v473
    %v1249 = vunpack.c.l.b16 %v474
    %v1250 = vunpack.c.l.b16 %v475
    %v1251 = vunpack.c.l.b16 %v476
    %v1252 = vunpack.c.l.b16 %v477
    %v1253 = vunpack.c.l.b16 %v478
    %v1254 = vunpack.c.l.b16 %v479
    %v1255 = vunpack.c.l.b16 %v480
    %v1256 = vunpack.c.l.b16 %v481
    %v1257 = vunpack.c.l.b16 %v482
    %v1258 = vunpack.c.l.b16 %v483
    %v1259 = vunpack.c.l.b16 %v484
    %v1260 = vunpack.c.l.b16 %v485
    %v1261 = vunpack.c.l.b16 %v486
    %v1262 = vunpack.c.l.b16 %v487
    %v1263 = vunpack.c.l.b16 %v488
    %v1264 = vunpack.c.l.b16 %v489
    %v1265 = vunpack.c.l.b16 %v490
    %v1266 = vunpack.c.l.b16 %v491
    %v1267 = vpack.c.b16 %v884, %v883
    %v1268 = vpack.c.b16 %v886, %v885
    %v1269 = vpack.c.b16 %v888, %v887
    %v1270 = vpack.c.b16 %v890, %v889
    %v1271 = vpack.c.b16 %v892, %v891
    %v1272 = vpack.c.b16 %v894, %v893
    %v1273 = vpack.c.b16 %v896, %v895
    %v1274 = vpack.c.b16 %v898, %v897
    %v1275 = vpack.c.b16 %v900, %v899
    %v1276 = vpack.c.b16 %v902, %v901
    %v1277 = vpack.c.b16 %v904, %v903
    %v1278 = vpack.c.b16 %v906, %v905
    %v1279 = vpack.c.b16 %v908, %v907
    %v1280 = vpack.c.b16 %v910, %v909
    %v1281 = vpack.c.b16 %v912, %v911
    %v1282 = vpack.c.b16 %v914, %v913
    %v1283 = vpack.c.b16 %v916, %v915
    %v1284 = vpack.c.b16 %v918, %v917
    %v1285 = vpack.c.b16 %v920, %v919
    %v1286 = vpack.c.b16 %v922, %v921
    %v1287 = vpack.c.b16 %v924, %v923
    %v1288 = vpack.c.b16 %v926, %v925
    %v1289 = vpack.c.b16 %v928, %v927
    %v1290 = vpack.c.b16 %v930, %v929
    %v1291 = vpack.c.b16 %v932, %v931
    %v1292 = vpack.c.b16 %v934, %v933
    %v1293 = vpack.c.b16 %v936, %v935
    %v1294 = vpack.c.b16 %v938, %v937
    %v1295 = vpack.c.b16 %v940, %v939
    %v1296 = vpack.c.b16 %v942, %v941
    %v1297 = vpack.c.b16 %v944, %v943
    %v1298 = vpack.c.b16 %v946, %v945
    %v1299 = vpack.c.b16 %v948, %v947
    %v1300 = vpack.c.b16 %v950, %v949
    %v1301 = vpack.c.b16 %v952, %v951
    %v1302 = vpack.c.b16 %v954, %v953
    %v1303 = vpack.c.b16 %v956, %v955
    %v1304 = vpack.c.b16 %v958, %v957
    %v1305 = vpack.c.b16 %v960, %v959
    %v1306 = vpack.c.b16 %v962, %v961
    %v1307 = vpack.c.b16 %v964, %v963
    %v1308 = vpack.c.b16 %v966, %v965
    %v1309 = vpack.c.b16 %v968, %v967
    %v1310 = vpack.c.b16 %v970, %v969
    %v1311 = vpack.c.b16 %v972, %v971
    %v1312 = vpack.c.b16 %v974, %v973
    %v1313 = vpack.c.b16 %v976, %v975
    %v1314 = vpack.c.b16 %v978, %v977
    %v1315 = vpack.c.b16 %v980, %v979
    %v1316 = vpack.c.b16 %v982, %v981
    %v1317 = vpack.c.b16 %v984, %v983
    %v1318 = vpack.c.b16 %v986, %v985
    %v1319 = vpack.c.b16 %v988, %v987
    %v1320 = vpack.c.b16 %v990, %v989
    %v1321 = vpack.c.b16 %v992, %v991
    %v1322 = vpack.c.b16 %v994, %v993
    %v1323 = vpack.c.b16 %v996, %v995
    %v1324 = vpack.c.b16 %v998, %v997
    %v1325 = vpack.c.b16 %v1000, %v999
    %v1326 = vpack.c.b16 %v1002, %v1001
    %v1327 = vpack.c.b16 %v1004, %v1003
    %v1328 = vpack.c.b16 %v1006, %v1005
    %v1329 = vpack.c.b16 %v1008, %v1007
    %v1330 = vpack.c.b16 %v1010, %v1009
    %v1331 = vpack.c.b16 %v1012, %v1011
    %v1332 = vpack.c.b16 %v1014, %v1013
    %v1333 = vpack.c.b16 %v1016, %v1015
    %v1334 = vpack.c.b16 %v1018, %v1017
    %v1335 = vpack.c.b16 %v1020, %v1019
    %v1336 = vpack.c.b16 %v1022, %v1021
    %v1337 = vpack.c.b16 %v1024, %v1023
    %v1338 = vpack.c.b16 %v1026, %v1025
    %v1339 = vpack.c.b16 %v1028, %v1027
    %v1340 = vpack.c.b16 %v1030, %v1029
    %v1341 = vpack.c.b16 %v1032, %v1031
    %v1342 = vpack.c.b16 %v1034, %v1033
    %v1343 = vpack.c.b16 %v1036, %v1035
    %v1344 = vpack.c.b16 %v1038, %v1037
    %v1345 = vpack.c.b16 %v1040, %v1039
    %v1346 = vpack.c.b16 %v1042, %v1041
    %v1347 = vpack.c.b16 %v1044, %v1043
    %v1348 = vpack.c.b16 %v1046, %v1045
    %v1349 = vpack.c.b16 %v1048, %v1047
    %v1350 = vpack.c.b16 %v1050, %v1049
    %v1351 = vpack.c.b16 %v1052, %v1051
    %v1352 = vpack.c.b16 %v1054, %v1053
    %v1353 = vpack.c.b16 %v1056, %v1055
    %v1354 = vpack.c.b16 %v1058, %v1057
    %v1355 = vpack.c.b16 %v1060, %v1059
    %v1356 = vpack.c.b16 %v1062, %v1061
    %v1357 = vpack.c.b16 %v1064, %v1063
    %v1358 = vpack.c.b16 %v1066, %v1065
    %v1359 = vpack.c.b16 %v1068, %v1067
    %v1360 = vpack.c.b16 %v1070, %v1069
    %v1361 = vpack.c.b16 %v1072, %v1071
    %v1362 = vpack.c.b16 %v1074, %v1073
    %v1363 = vpack.c.b16 %v1076, %v1075
    %v1364 = vpack.c.b16 %v1078, %v1077
    %v1365 = vpack.c.b16 %v1080, %v1079
    %v1366 = vpack.c.b16 %v1082, %v1081
    %v1367 = vpack.c.b16 %v1084, %v1083
    %v1368 = vpack.c.b16 %v1086, %v1085
    %v1369 = vpack.c.b16 %v1088, %v1087
    %v1370 = vpack.c.b16 %v1090, %v1089
    %v1371 = vpack.c.b16 %v1092, %v1091
    %v1372 = vpack.c.b16 %v1094, %v1093
    %v1373 = vpack.c.b16 %v1096, %v1095
    %v1374 = vpack.c.b16 %v1098, %v1097
    %v1375 = vpack.c.b16 %v1100, %v1099
    %v1376 = vpack.c.b16 %v1102, %v1101
    %v1377 = vpack.c.b16 %v1104, %v1103
    %v1378 = vpack.c.b16 %v1106, %v1105
    %v1379 = vpack.c.b16 %v1108, %v1107
    %v1380 = vpack.c.b16 %v1110, %v1109
    %v1381 = vpack.c.b16 %v1112, %v1111
    %v1382 = vpack.c.b16 %v1114, %v1113
    %v1383 = vpack.c.b16 %v1116, %v1115
    %v1384 = vpack.c.b16 %v1118, %v1117
    %v1385 = vpack.c.b16 %v1120, %v1119
    %v1386 = vpack.c.b16 %v1122, %v1121
    %v1387 = vpack.c.b16 %v1124, %v1123
    %v1388 = vpack.c.b16 %v1126, %v1125
    %v1389 = vpack.c.b16 %v1128, %v1127
    %v1390 = vpack.c.b16 %v1130, %v1129
    %v1391 = vpack.c.b16 %v1132, %v1131
    %v1392 = vpack.c.b16 %v1134, %v1133
    %v1393 = vpack.c.b16 %v1136, %v1135
    %v1394 = vpack.c.b16 %v1138, %v1137
    %v1395 = vpack.c.b16 %v1140, %v1139
    %v1396 = vpack.c.b16 %v1142, %v1141
    %v1397 = vpack.c.b16 %v1144, %v1143
    %v1398 = vpack.c.b16 %v1146, %v1145
    %v1399 = vpack.c.b16 %v1148, %v1147
    %v1400 = vpack.c.b16 %v1150, %v1149
    %v1401 = vpack.c.b16 %v1152, %v1151
    %v1402 = vpack.c.b16 %v1154, %v1153
    %v1403 = vpack.c.b16 %v1156, %v1155
    %v1404 = vpack.c.b16 %v1158, %v1157
    %v1405 = vpack.c.b16 %v1160, %v1159
    %v1406 = vpack.c.b16 %v1162, %v1161
    %v1407 = vpack.c.b16 %v1164, %v1163
    %v1408 = vpack.c.b16 %v1166, %v1165
    %v1409 = vpack.c.b16 %v1168, %v1167
    %v1410 = vpack.c.b16 %v1170, %v1169
    %v1411 = vpack.c.b16 %v1172, %v1171
    %v1412 = vpack.c.b16 %v1174, %v1173
    %v1413 = vpack.c.b16 %v1176, %v1175
    %v1414 = vpack.c.b16 %v1178, %v1177
    %v1415 = vpack.c.b16 %v1180, %v1179
    %v1416 = vpack.c.b16 %v1182, %v1181
    %v1417 = vpack.c.b16 %v1184, %v1183
    %v1418 = vpack.c.b16 %v1186, %v1185
    %v1419 = vpack.c.b16 %v1188, %v1187
    %v1420 = vpack.c.b16 %v1190, %v1189
    %v1421 = vpack.c.b16 %v1192, %v1191
    %v1422 = vpack.c.b16 %v1194, %v1193
    %v1423 = vpack.c.b16 %v1196, %v1195
    %v1424 = vpack.c.b16 %v1198, %v1197
    %v1425 = vpack.c.b16 %v1200, %v1199
    %v1426 = vpack.c.b16 %v1202, %v1201
    %v1427 = vpack.c.b16 %v1204, %v1203
    %v1428 = vpack.c.b16 %v1206, %v1205
    %v1429 = vpack.c.b16 %v1208, %v1207
    %v1430 = vpack.c.b16 %v1210, %v1209
    %v1431 = vpack.c.b16 %v1212, %v1211
    %v1432 = vpack.c.b16 %v1214, %v1213
    %v1433 = vpack.c.b16 %v1216, %v1215
    %v1434 = vpack.c.b16 %v1218, %v1217
    %v1435 = vpack.c.b16 %v1220, %v1219
    %v1436 = vpack.c.b16 %v1222, %v1221
    %v1437 = vpack.c.b16 %v1224, %v1223
    %v1438 = vpack.c.b16 %v1226, %v1225
    %v1439 = vpack.c.b16 %v1228, %v1227
    %v1440 = vpack.c.b16 %v1230, %v1229
    %v1441 = vpack.c.b16 %v1232, %v1231
    %v1442 = vpack.c.b16 %v1234, %v1233
    %v1443 = vpack.c.b16 %v1236, %v1235
    %v1444 = vpack.c.b16 %v1238, %v1237
    %v1445 = vpack.c.b16 %v1240, %v1239
    %v1446 = vpack.c.b16 %v1242, %v1241
    %v1447 = vpack.c.b16 %v1244, %v1243
    %v1448 = vpack.c.b16 %v1246, %v1245
    %v1449 = vpack.c.b16 %v1248, %v1247
    %v1450 = vpack.c.b16 %v1250, %v1249
    %v1451 = vpack.c.b16 %v1252, %v1251
    %v1452 = vpack.c.b16 %v1254, %v1253
    %v1453 = vpack.c.b16 %v1256, %v1255
    %v1454 = vpack.c.b16 %v1258, %v1257
    %v1455 = vpack.c.b16 %v1260, %v1259
    %v1456 = vpack.c.b16 %v1262, %v1261
    %v1457 = vpack.c.b16 %v1264, %v1263
    %v1458 = vpack.c.b16 %v1266, %v1265
    %1651 = vmatprep.subr.bf16.mxu0 0
    %1652 = vmatpush1.bf16.msra.mxu0 %v1274
    %1653 = vmatprep.subr.bf16.mxu0 0
    %1654 = vmatpush1.bf16.msra.mxu0 %v1273
    %1655 = vmatprep.subr.bf16.mxu0 0
    %1656 = vmatpush1.bf16.msra.mxu0 %v1272
    %1657 = vmatprep.subr.bf16.mxu0 0
    %1658 = vmatpush1.bf16.msra.mxu0 %v1271
    %1659 = vmatprep.subr.bf16.mxu0 0
    %1660 = vmatpush1.bf16.msra.mxu0 %v1270
    %1661 = vmatprep.subr.bf16.mxu0 0
    %1662 = vmatpush1.bf16.msra.mxu0 %v1269
    %1663 = vmatprep.subr.bf16.mxu0 0
    %1664 = vmatpush1.bf16.msra.mxu0 %v1268
    %1665 = vmatprep.subr.bf16.mxu0 0
    %1666 = vmatpush1.bf16.msra.mxu0 %v1267
    %1667 = vmatprep.subr.bf16.mxu0 0
    %1668 = vmatpush2.bf16.msra.mxu0 %v1282
    %1669 = vmatprep.subr.bf16.mxu0 0
    %1670 = vmatpush2.bf16.msra.mxu0 %v1281
    %1671 = vmatprep.subr.bf16.mxu0 0
    %1672 = vmatpush2.bf16.msra.mxu0 %v1280
    %1673 = vmatprep.subr.bf16.mxu0 0
    %1674 = vmatpush2.bf16.msra.mxu0 %v1279
    %1675 = vmatprep.subr.bf16.mxu0 0
    %1676 = vmatpush2.bf16.msra.mxu0 %v1278
    %1677 = vmatprep.subr.bf16.mxu0 0
    %1678 = vmatpush2.bf16.msra.mxu0 %v1277
    %1679 = vmatprep.subr.bf16.mxu0 0
    %1680 = vmatpush2.bf16.msra.mxu0 %v1276
    %1681 = vmatprep.subr.bf16.mxu0 0
    %1682 = vmatpush2.bf16.msra.mxu0 %v1275
    %1683 = vmatprep.mubr.bf16.mxu0 %v85
    %1684 = vmatmul.mubr.bf16.gmra.mxu0 %v84
    %v1685 = vpop.f32.mrf.mxu0
    %v1686 = vadd.f32 %v497, %v1685
    %v1687 = vpop.f32.mrf.mxu0
    %v1688 = vpop.f32.mrf.mxu0
    %v1689 = vpop.f32.mrf.mxu0
    %1690 = vdwg.mxu0
    %1691 = vmatprep.subr.bf16.mxu0 0
    %1692 = vmatpush1.bf16.msra.mxu0 %v1290
    %1693 = vmatprep.subr.bf16.mxu0 0
    %1694 = vmatpush1.bf16.msra.mxu0 %v1289
    %1695 = vmatprep.subr.bf16.mxu0 0
    %1696 = vmatpush1.bf16.msra.mxu0 %v1288
    %1697 = vmatprep.subr.bf16.mxu0 0
    %1698 = vmatpush1.bf16.msra.mxu0 %v1287
    %1699 = vmatprep.subr.bf16.mxu0 0
    %1700 = vmatpush1.bf16.msra.mxu0 %v1286
    %1701 = vmatprep.subr.bf16.mxu0 0
    %1702 = vmatpush1.bf16.msra.mxu0 %v1285
    %1703 = vmatprep.subr.bf16.mxu0 0
    %1704 = vmatpush1.bf16.msra.mxu0 %v1284
    %1705 = vmatprep.subr.bf16.mxu0 0
    %1706 = vmatpush1.bf16.msra.mxu0 %v1283
    %1707 = vmatprep.subr.bf16.mxu0 0
    %1708 = vmatpush2.bf16.msra.mxu0 %v1298
    %1709 = vmatprep.subr.bf16.mxu0 0
    %1710 = vmatpush2.bf16.msra.mxu0 %v1297
    %1711 = vmatprep.subr.bf16.mxu0 0
    %1712 = vmatpush2.bf16.msra.mxu0 %v1296
    %1713 = vmatprep.subr.bf16.mxu0 0
    %1714 = vmatpush2.bf16.msra.mxu0 %v1295
    %1715 = vmatprep.subr.bf16.mxu0 0
    %1716 = vmatpush2.bf16.msra.mxu0 %v1294
    %1717 = vmatprep.subr.bf16.mxu0 0
    %1718 = vmatpush2.bf16.msra.mxu0 %v1293
    %1719 = vmatprep.subr.bf16.mxu0 0
    %1720 = vmatpush2.bf16.msra.mxu0 %v1292
    %1721 = vmatprep.subr.bf16.mxu0 0
    %1722 = vmatpush2.bf16.msra.mxu0 %v1291
    %1723 = vmatprep.mubr.bf16.mxu0 %v87
    %1724 = vmatmul.mubr.bf16.gmra.mxu0 %v86
    %v1725 = vpop.f32.mrf.mxu0
    %v1726 = vadd.f32 %v1686, %v1725
    %v1727 = vpop.f32.mrf.mxu0
    %v1728 = vpop.f32.mrf.mxu0
    %v1729 = vpop.f32.mrf.mxu0
    %1730 = vdwg.mxu0
    %1731 = vmatprep.subr.bf16.mxu0 0
    %1732 = vmatpush1.bf16.msra.mxu0 %v1306
    %1733 = vmatprep.subr.bf16.mxu0 0
    %1734 = vmatpush1.bf16.msra.mxu0 %v1305
    %1735 = vmatprep.subr.bf16.mxu0 0
    %1736 = vmatpush1.bf16.msra.mxu0 %v1304
    %1737 = vmatprep.subr.bf16.mxu0 0
    %1738 = vmatpush1.bf16.msra.mxu0 %v1303
    %1739 = vmatprep.subr.bf16.mxu0 0
    %1740 = vmatpush1.bf16.msra.mxu0 %v1302
    %1741 = vmatprep.subr.bf16.mxu0 0
    %1742 = vmatpush1.bf16.msra.mxu0 %v1301
    %1743 = vmatprep.subr.bf16.mxu0 0
    %1744 = vmatpush1.bf16.msra.mxu0 %v1300
    %1745 = vmatprep.subr.bf16.mxu0 0
    %1746 = vmatpush1.bf16.msra.mxu0 %v1299
    %1747 = vmatprep.subr.bf16.mxu0 0
    %1748 = vmatpush2.bf16.msra.mxu0 %v1314
    %1749 = vmatprep.subr.bf16.mxu0 0
    %1750 = vmatpush2.bf16.msra.mxu0 %v1313
    %1751 = vmatprep.subr.bf16.mxu0 0
    %1752 = vmatpush2.bf16.msra.mxu0 %v1312
    %1753 = vmatprep.subr.bf16.mxu0 0
    %1754 = vmatpush2.bf16.msra.mxu0 %v1311
    %1755 = vmatprep.subr.bf16.mxu0 0
    %1756 = vmatpush2.bf16.msra.mxu0 %v1310
    %1757 = vmatprep.subr.bf16.mxu0 0
    %1758 = vmatpush2.bf16.msra.mxu0 %v1309
    %1759 = vmatprep.subr.bf16.mxu0 0
    %1760 = vmatpush2.bf16.msra.mxu0 %v1308
    %1761 = vmatprep.subr.bf16.mxu0 0
    %1762 = vmatpush2.bf16.msra.mxu0 %v1307
    %1763 = vmatprep.mubr.bf16.mxu0 %v89
    %1764 = vmatmul.mubr.bf16.gmra.mxu0 %v88
    %v1765 = vpop.f32.mrf.mxu0
    %v1766 = vadd.f32 %v1726, %v1765
    %v1767 = vpop.f32.mrf.mxu0
    %v1768 = vpop.f32.mrf.mxu0
    %v1769 = vpop.f32.mrf.mxu0
    %1770 = vdwg.mxu0
    %1771 = vmatprep.subr.bf16.mxu0 0
    %1772 = vmatpush1.bf16.msra.mxu0 %v1322
    %1773 = vmatprep.subr.bf16.mxu0 0
    %1774 = vmatpush1.bf16.msra.mxu0 %v1321
    %1775 = vmatprep.subr.bf16.mxu0 0
    %1776 = vmatpush1.bf16.msra.mxu0 %v1320
    %1777 = vmatprep.subr.bf16.mxu0 0
    %1778 = vmatpush1.bf16.msra.mxu0 %v1319
    %1779 = vmatprep.subr.bf16.mxu0 0
    %1780 = vmatpush1.bf16.msra.mxu0 %v1318
    %1781 = vmatprep.subr.bf16.mxu0 0
    %1782 = vmatpush1.bf16.msra.mxu0 %v1317
    %1783 = vmatprep.subr.bf16.mxu0 0
    %1784 = vmatpush1.bf16.msra.mxu0 %v1316
    %1785 = vmatprep.subr.bf16.mxu0 0
    %1786 = vmatpush1.bf16.msra.mxu0 %v1315
    %1787 = vmatprep.subr.bf16.mxu0 0
    %1788 = vmatpush2.bf16.msra.mxu0 %v1330
    %1789 = vmatprep.subr.bf16.mxu0 0
    %1790 = vmatpush2.bf16.msra.mxu0 %v1329
    %1791 = vmatprep.subr.bf16.mxu0 0
    %1792 = vmatpush2.bf16.msra.mxu0 %v1328
    %1793 = vmatprep.subr.bf16.mxu0 0
    %1794 = vmatpush2.bf16.msra.mxu0 %v1327
    %1795 = vmatprep.subr.bf16.mxu0 0
    %1796 = vmatpush2.bf16.msra.mxu0 %v1326
    %1797 = vmatprep.subr.bf16.mxu0 0
    %1798 = vmatpush2.bf16.msra.mxu0 %v1325
    %1799 = vmatprep.subr.bf16.mxu0 0
    %1800 = vmatpush2.bf16.msra.mxu0 %v1324
    %1801 = vmatprep.subr.bf16.mxu0 0
    %1802 = vmatpush2.bf16.msra.mxu0 %v1323
    %1803 = vmatprep.mubr.bf16.mxu0 %v91
    %1804 = vmatmul.mubr.bf16.gmra.mxu0 %v90
    %v1805 = vpop.f32.mrf.mxu0
    %v1806 = vadd.f32 %v1766, %v1805
    %v1807 = vpop.f32.mrf.mxu0
    %v1808 = vpop.f32.mrf.mxu0
    %v1809 = vpop.f32.mrf.mxu0
    %1810 = vdwg.mxu0
    %1811 = vmatprep.subr.bf16.mxu0 0
    %1812 = vmatpush1.bf16.msra.mxu0 %v1338
    %1813 = vmatprep.subr.bf16.mxu0 0
    %1814 = vmatpush1.bf16.msra.mxu0 %v1337
    %1815 = vmatprep.subr.bf16.mxu0 0
    %1816 = vmatpush1.bf16.msra.mxu0 %v1336
    %1817 = vmatprep.subr.bf16.mxu0 0
    %1818 = vmatpush1.bf16.msra.mxu0 %v1335
    %1819 = vmatprep.subr.bf16.mxu0 0
    %1820 = vmatpush1.bf16.msra.mxu0 %v1334
    %1821 = vmatprep.subr.bf16.mxu0 0
    %1822 = vmatpush1.bf16.msra.mxu0 %v1333
    %1823 = vmatprep.subr.bf16.mxu0 0
    %1824 = vmatpush1.bf16.msra.mxu0 %v1332
    %1825 = vmatprep.subr.bf16.mxu0 0
    %1826 = vmatpush1.bf16.msra.mxu0 %v1331
    %1827 = vmatprep.subr.bf16.mxu0 0
    %1828 = vmatpush2.bf16.msra.mxu0 %v1346
    %1829 = vmatprep.subr.bf16.mxu0 0
    %1830 = vmatpush2.bf16.msra.mxu0 %v1345
    %1831 = vmatprep.subr.bf16.mxu0 0
    %1832 = vmatpush2.bf16.msra.mxu0 %v1344
    %1833 = vmatprep.subr.bf16.mxu0 0
    %1834 = vmatpush2.bf16.msra.mxu0 %v1343
    %1835 = vmatprep.subr.bf16.mxu0 0
    %1836 = vmatpush2.bf16.msra.mxu0 %v1342
    %1837 = vmatprep.subr.bf16.mxu0 0
    %1838 = vmatpush2.bf16.msra.mxu0 %v1341
    %1839 = vmatprep.subr.bf16.mxu0 0
    %1840 = vmatpush2.bf16.msra.mxu0 %v1340
    %1841 = vmatprep.subr.bf16.mxu0 0
    %1842 = vmatpush2.bf16.msra.mxu0 %v1339
    %1843 = vmatprep.mubr.bf16.mxu0 %v93
    %1844 = vmatmul.mubr.bf16.gmra.mxu0 %v92
    %v1845 = vpop.f32.mrf.mxu0
    %v1846 = vadd.f32 %v1806, %v1845
    %v1847 = vpop.f32.mrf.mxu0
    %v1848 = vpop.f32.mrf.mxu0
    %v1849 = vpop.f32.mrf.mxu0
    %1850 = vdwg.mxu0
    %1851 = vmatprep.subr.bf16.mxu0 0
    %1852 = vmatpush1.bf16.msra.mxu0 %v1354
    %1853 = vmatprep.subr.bf16.mxu0 0
    %1854 = vmatpush1.bf16.msra.mxu0 %v1353
    %1855 = vmatprep.subr.bf16.mxu0 0
    %1856 = vmatpush1.bf16.msra.mxu0 %v1352
    %1857 = vmatprep.subr.bf16.mxu0 0
    %1858 = vmatpush1.bf16.msra.mxu0 %v1351
    %1859 = vmatprep.subr.bf16.mxu0 0
    %1860 = vmatpush1.bf16.msra.mxu0 %v1350
    %1861 = vmatprep.subr.bf16.mxu0 0
    %1862 = vmatpush1.bf16.msra.mxu0 %v1349
    %1863 = vmatprep.subr.bf16.mxu0 0
    %1864 = vmatpush1.bf16.msra.mxu0 %v1348
    %1865 = vmatprep.subr.bf16.mxu0 0
    %1866 = vmatpush1.bf16.msra.mxu0 %v1347
    %1867 = vmatprep.subr.bf16.mxu0 0
    %1868 = vmatpush2.bf16.msra.mxu0 %v1362
    %1869 = vmatprep.subr.bf16.mxu0 0
    %1870 = vmatpush2.bf16.msra.mxu0 %v1361
    %1871 = vmatprep.subr.bf16.mxu0 0
    %1872 = vmatpush2.bf16.msra.mxu0 %v1360
    %1873 = vmatprep.subr.bf16.mxu0 0
    %1874 = vmatpush2.bf16.msra.mxu0 %v1359
    %1875 = vmatprep.subr.bf16.mxu0 0
    %1876 = vmatpush2.bf16.msra.mxu0 %v1358
    %1877 = vmatprep.subr.bf16.mxu0 0
    %1878 = vmatpush2.bf16.msra.mxu0 %v1357
    %1879 = vmatprep.subr.bf16.mxu0 0
    %1880 = vmatpush2.bf16.msra.mxu0 %v1356
    %1881 = vmatprep.subr.bf16.mxu0 0
    %1882 = vmatpush2.bf16.msra.mxu0 %v1355
    %1883 = vmatprep.mubr.bf16.mxu0 %v95
    %1884 = vmatmul.mubr.bf16.gmra.mxu0 %v94
    %v1885 = vpop.f32.mrf.mxu0
    %v1886 = vadd.f32 %v1846, %v1885
    %v1887 = vpop.f32.mrf.mxu0
    %v1888 = vpop.f32.mrf.mxu0
    %v1889 = vpop.f32.mrf.mxu0
    %1890 = vdwg.mxu0
    %1891 = vmatprep.subr.bf16.mxu0 0
    %1892 = vmatpush1.bf16.msra.mxu0 %v1370
    %1893 = vmatprep.subr.bf16.mxu0 0
    %1894 = vmatpush1.bf16.msra.mxu0 %v1369
    %1895 = vmatprep.subr.bf16.mxu0 0
    %1896 = vmatpush1.bf16.msra.mxu0 %v1368
    %1897 = vmatprep.subr.bf16.mxu0 0
    %1898 = vmatpush1.bf16.msra.mxu0 %v1367
    %1899 = vmatprep.subr.bf16.mxu0 0
    %1900 = vmatpush1.bf16.msra.mxu0 %v1366
    %1901 = vmatprep.subr.bf16.mxu0 0
    %1902 = vmatpush1.bf16.msra.mxu0 %v1365
    %1903 = vmatprep.subr.bf16.mxu0 0
    %1904 = vmatpush1.bf16.msra.mxu0 %v1364
    %1905 = vmatprep.subr.bf16.mxu0 0
    %1906 = vmatpush1.bf16.msra.mxu0 %v1363
    %1907 = vmatprep.subr.bf16.mxu0 0
    %1908 = vmatpush2.bf16.msra.mxu0 %v1378
    %1909 = vmatprep.subr.bf16.mxu0 0
    %1910 = vmatpush2.bf16.msra.mxu0 %v1377
    %1911 = vmatprep.subr.bf16.mxu0 0
    %1912 = vmatpush2.bf16.msra.mxu0 %v1376
    %1913 = vmatprep.subr.bf16.mxu0 0
    %1914 = vmatpush2.bf16.msra.mxu0 %v1375
    %1915 = vmatprep.subr.bf16.mxu0 0
    %1916 = vmatpush2.bf16.msra.mxu0 %v1374
    %1917 = vmatprep.subr.bf16.mxu0 0
    %1918 = vmatpush2.bf16.msra.mxu0 %v1373
    %1919 = vmatprep.subr.bf16.mxu0 0
    %1920 = vmatpush2.bf16.msra.mxu0 %v1372
    %1921 = vmatprep.subr.bf16.mxu0 0
    %1922 = vmatpush2.bf16.msra.mxu0 %v1371
    %1923 = vmatprep.mubr.bf16.mxu0 %v97
    %1924 = vmatmul.mubr.bf16.gmra.mxu0 %v96
    %v1925 = vpop.f32.mrf.mxu0
    %v1926 = vadd.f32 %v1886, %v1925
    %v1927 = vpop.f32.mrf.mxu0
    %v1928 = vpop.f32.mrf.mxu0
    %v1929 = vpop.f32.mrf.mxu0
    %1930 = vdwg.mxu0
    %1931 = vmatprep.subr.bf16.mxu0 0
    %1932 = vmatpush1.bf16.msra.mxu0 %v1386
    %1933 = vmatprep.subr.bf16.mxu0 0
    %1934 = vmatpush1.bf16.msra.mxu0 %v1385
    %1935 = vmatprep.subr.bf16.mxu0 0
    %1936 = vmatpush1.bf16.msra.mxu0 %v1384
    %1937 = vmatprep.subr.bf16.mxu0 0
    %1938 = vmatpush1.bf16.msra.mxu0 %v1383
    %1939 = vmatprep.subr.bf16.mxu0 0
    %1940 = vmatpush1.bf16.msra.mxu0 %v1382
    %1941 = vmatprep.subr.bf16.mxu0 0
    %1942 = vmatpush1.bf16.msra.mxu0 %v1381
    %1943 = vmatprep.subr.bf16.mxu0 0
    %1944 = vmatpush1.bf16.msra.mxu0 %v1380
    %1945 = vmatprep.subr.bf16.mxu0 0
    %1946 = vmatpush1.bf16.msra.mxu0 %v1379
    %1947 = vmatprep.subr.bf16.mxu0 0
    %1948 = vmatpush2.bf16.msra.mxu0 %v1394
    %1949 = vmatprep.subr.bf16.mxu0 0
    %1950 = vmatpush2.bf16.msra.mxu0 %v1393
    %1951 = vmatprep.subr.bf16.mxu0 0
    %1952 = vmatpush2.bf16.msra.mxu0 %v1392
    %1953 = vmatprep.subr.bf16.mxu0 0
    %1954 = vmatpush2.bf16.msra.mxu0 %v1391
    %1955 = vmatprep.subr.bf16.mxu0 0
    %1956 = vmatpush2.bf16.msra.mxu0 %v1390
    %1957 = vmatprep.subr.bf16.mxu0 0
    %1958 = vmatpush2.bf16.msra.mxu0 %v1389
    %1959 = vmatprep.subr.bf16.mxu0 0
    %1960 = vmatpush2.bf16.msra.mxu0 %v1388
    %1961 = vmatprep.subr.bf16.mxu0 0
    %1962 = vmatpush2.bf16.msra.mxu0 %v1387
    %1963 = vmatprep.mubr.bf16.mxu0 %v99
    %1964 = vmatmul.mubr.bf16.gmra.mxu0 %v98
    %v1965 = vpop.f32.mrf.mxu0
    %v1966 = vadd.f32 %v1926, %v1965
    %v1967 = vpop.f32.mrf.mxu0
    %v1968 = vpop.f32.mrf.mxu0
    %v1969 = vpop.f32.mrf.mxu0
    %1970 = vdwg.mxu0
    %1971 = vmatprep.subr.bf16.mxu0 0
    %1972 = vmatpush1.bf16.msra.mxu0 %v1402
    %1973 = vmatprep.subr.bf16.mxu0 0
    %1974 = vmatpush1.bf16.msra.mxu0 %v1401
    %1975 = vmatprep.subr.bf16.mxu0 0
    %1976 = vmatpush1.bf16.msra.mxu0 %v1400
    %1977 = vmatprep.subr.bf16.mxu0 0
    %1978 = vmatpush1.bf16.msra.mxu0 %v1399
    %1979 = vmatprep.subr.bf16.mxu0 0
    %1980 = vmatpush1.bf16.msra.mxu0 %v1398
    %1981 = vmatprep.subr.bf16.mxu0 0
    %1982 = vmatpush1.bf16.msra.mxu0 %v1397
    %1983 = vmatprep.subr.bf16.mxu0 0
    %1984 = vmatpush1.bf16.msra.mxu0 %v1396
    %1985 = vmatprep.subr.bf16.mxu0 0
    %1986 = vmatpush1.bf16.msra.mxu0 %v1395
    %1987 = vmatprep.subr.bf16.mxu0 0
    %1988 = vmatpush2.bf16.msra.mxu0 %v1410
    %1989 = vmatprep.subr.bf16.mxu0 0
    %1990 = vmatpush2.bf16.msra.mxu0 %v1409
    %1991 = vmatprep.subr.bf16.mxu0 0
    %1992 = vmatpush2.bf16.msra.mxu0 %v1408
    %1993 = vmatprep.subr.bf16.mxu0 0
    %1994 = vmatpush2.bf16.msra.mxu0 %v1407
    %1995 = vmatprep.subr.bf16.mxu0 0
    %1996 = vmatpush2.bf16.msra.mxu0 %v1406
    %1997 = vmatprep.subr.bf16.mxu0 0
    %1998 = vmatpush2.bf16.msra.mxu0 %v1405
    %1999 = vmatprep.subr.bf16.mxu0 0
    %2000 = vmatpush2.bf16.msra.mxu0 %v1404
    %2001 = vmatprep.subr.bf16.mxu0 0
    %2002 = vmatpush2.bf16.msra.mxu0 %v1403
    %2003 = vmatprep.mubr.bf16.mxu0 %v101
    %2004 = vmatmul.mubr.bf16.gmra.mxu0 %v100
    %v2005 = vpop.f32.mrf.mxu0
    %v2006 = vadd.f32 %v1966, %v2005
    %v2007 = vpop.f32.mrf.mxu0
    %v2008 = vpop.f32.mrf.mxu0
    %v2009 = vpop.f32.mrf.mxu0
    %2010 = vdwg.mxu0
    %2011 = vmatprep.subr.bf16.mxu0 0
    %2012 = vmatpush1.bf16.msra.mxu0 %v1418
    %2013 = vmatprep.subr.bf16.mxu0 0
    %2014 = vmatpush1.bf16.msra.mxu0 %v1417
    %2015 = vmatprep.subr.bf16.mxu0 0
    %2016 = vmatpush1.bf16.msra.mxu0 %v1416
    %2017 = vmatprep.subr.bf16.mxu0 0
    %2018 = vmatpush1.bf16.msra.mxu0 %v1415
    %2019 = vmatprep.subr.bf16.mxu0 0
    %2020 = vmatpush1.bf16.msra.mxu0 %v1414
    %2021 = vmatprep.subr.bf16.mxu0 0
    %2022 = vmatpush1.bf16.msra.mxu0 %v1413
    %2023 = vmatprep.subr.bf16.mxu0 0
    %2024 = vmatpush1.bf16.msra.mxu0 %v1412
    %2025 = vmatprep.subr.bf16.mxu0 0
    %2026 = vmatpush1.bf16.msra.mxu0 %v1411
    %2027 = vmatprep.subr.bf16.mxu0 0
    %2028 = vmatpush2.bf16.msra.mxu0 %v1426
    %2029 = vmatprep.subr.bf16.mxu0 0
    %2030 = vmatpush2.bf16.msra.mxu0 %v1425
    %2031 = vmatprep.subr.bf16.mxu0 0
    %2032 = vmatpush2.bf16.msra.mxu0 %v1424
    %2033 = vmatprep.subr.bf16.mxu0 0
    %2034 = vmatpush2.bf16.msra.mxu0 %v1423
    %2035 = vmatprep.subr.bf16.mxu0 0
    %2036 = vmatpush2.bf16.msra.mxu0 %v1422
    %2037 = vmatprep.subr.bf16.mxu0 0
    %2038 = vmatpush2.bf16.msra.mxu0 %v1421
    %2039 = vmatprep.subr.bf16.mxu0 0
    %2040 = vmatpush2.bf16.msra.mxu0 %v1420
    %2041 = vmatprep.subr.bf16.mxu0 0
    %2042 = vmatpush2.bf16.msra.mxu0 %v1419
    %2043 = vmatprep.mubr.bf16.mxu0 %v103
    %2044 = vmatmul.mubr.bf16.gmra.mxu0 %v102
    %v2045 = vpop.f32.mrf.mxu0
    %v2046 = vadd.f32 %v2006, %v2045
    %v2047 = vpop.f32.mrf.mxu0
    %v2048 = vpop.f32.mrf.mxu0
    %v2049 = vpop.f32.mrf.mxu0
    %2050 = vdwg.mxu0
    %2051 = vmatprep.subr.bf16.mxu0 0
    %2052 = vmatpush1.bf16.msra.mxu0 %v1434
    %2053 = vmatprep.subr.bf16.mxu0 0
    %2054 = vmatpush1.bf16.msra.mxu0 %v1433
    %2055 = vmatprep.subr.bf16.mxu0 0
    %2056 = vmatpush1.bf16.msra.mxu0 %v1432
    %2057 = vmatprep.subr.bf16.mxu0 0
    %2058 = vmatpush1.bf16.msra.mxu0 %v1431
    %2059 = vmatprep.subr.bf16.mxu0 0
    %2060 = vmatpush1.bf16.msra.mxu0 %v1430
    %2061 = vmatprep.subr.bf16.mxu0 0
    %2062 = vmatpush1.bf16.msra.mxu0 %v1429
    %2063 = vmatprep.subr.bf16.mxu0 0
    %2064 = vmatpush1.bf16.msra.mxu0 %v1428
    %2065 = vmatprep.subr.bf16.mxu0 0
    %2066 = vmatpush1.bf16.msra.mxu0 %v1427
    %2067 = vmatprep.subr.bf16.mxu0 0
    %2068 = vmatpush2.bf16.msra.mxu0 %v1442
    %2069 = vmatprep.subr.bf16.mxu0 0
    %2070 = vmatpush2.bf16.msra.mxu0 %v1441
    %2071 = vmatprep.subr.bf16.mxu0 0
    %2072 = vmatpush2.bf16.msra.mxu0 %v1440
    %2073 = vmatprep.subr.bf16.mxu0 0
    %2074 = vmatpush2.bf16.msra.mxu0 %v1439
    %2075 = vmatprep.subr.bf16.mxu0 0
    %2076 = vmatpush2.bf16.msra.mxu0 %v1438
    %2077 = vmatprep.subr.bf16.mxu0 0
    %2078 = vmatpush2.bf16.msra.mxu0 %v1437
    %2079 = vmatprep.subr.bf16.mxu0 0
    %2080 = vmatpush2.bf16.msra.mxu0 %v1436
    %2081 = vmatprep.subr.bf16.mxu0 0
    %2082 = vmatpush2.bf16.msra.mxu0 %v1435
    %2083 = vmatprep.mubr.bf16.mxu0 %v105
    %2084 = vmatmul.mubr.bf16.gmra.mxu0 %v104
    %v2085 = vpop.f32.mrf.mxu0
    %v2086 = vadd.f32 %v2046, %v2085
    %v2087 = vpop.f32.mrf.mxu0
    %v2088 = vpop.f32.mrf.mxu0
    %v2089 = vpop.f32.mrf.mxu0
    %2090 = vdwg.mxu0
    %2091 = vmatprep.subr.bf16.mxu0 0
    %2092 = vmatpush1.bf16.msra.mxu0 %v1450
    %2093 = vmatprep.subr.bf16.mxu0 0
    %2094 = vmatpush1.bf16.msra.mxu0 %v1449
    %2095 = vmatprep.subr.bf16.mxu0 0
    %2096 = vmatpush1.bf16.msra.mxu0 %v1448
    %2097 = vmatprep.subr.bf16.mxu0 0
    %2098 = vmatpush1.bf16.msra.mxu0 %v1447
    %2099 = vmatprep.subr.bf16.mxu0 0
    %2100 = vmatpush1.bf16.msra.mxu0 %v1446
    %2101 = vmatprep.subr.bf16.mxu0 0
    %2102 = vmatpush1.bf16.msra.mxu0 %v1445
    %2103 = vmatprep.subr.bf16.mxu0 0
    %2104 = vmatpush1.bf16.msra.mxu0 %v1444
    %2105 = vmatprep.subr.bf16.mxu0 0
    %2106 = vmatpush1.bf16.msra.mxu0 %v1443
    %2107 = vmatprep.subr.bf16.mxu0 0
    %2108 = vmatpush2.bf16.msra.mxu0 %v1458
    %2109 = vmatprep.subr.bf16.mxu0 0
    %2110 = vmatpush2.bf16.msra.mxu0 %v1457
    %2111 = vmatprep.subr.bf16.mxu0 0
    %2112 = vmatpush2.bf16.msra.mxu0 %v1456
    %2113 = vmatprep.subr.bf16.mxu0 0
    %2114 = vmatpush2.bf16.msra.mxu0 %v1455
    %2115 = vmatprep.subr.bf16.mxu0 0
    %2116 = vmatpush2.bf16.msra.mxu0 %v1454
    %2117 = vmatprep.subr.bf16.mxu0 0
    %2118 = vmatpush2.bf16.msra.mxu0 %v1453
    %2119 = vmatprep.subr.bf16.mxu0 0
    %2120 = vmatpush2.bf16.msra.mxu0 %v1452
    %2121 = vmatprep.subr.bf16.mxu0 0
    %2122 = vmatpush2.bf16.msra.mxu0 %v1451
    %2123 = vmatprep.mubr.bf16.mxu0 %v107
    %2124 = vmatmul.mubr.bf16.gmra.mxu0 %v106
    %v2125 = vpop.f32.mrf.mxu0
    %v2126 = vadd.f32 %v2086, %v2125
    %v2127 = vpop.f32.mrf.mxu0
    %v2128 = vpop.f32.mrf.mxu0
    %v2129 = vpop.f32.mrf.mxu0
    %2130 = vdwg.mxu0
    %v2131 = vmax.f32 %v2126, 0.0
    %v2132 = vpack.c.bf16 %v2131, %v2131
    %v2133 = vld [vmem:[%s3] sm:$0xf]
    %v2134 = vld [vmem:[%s3 + $0x4] sm:$0xf]
    %v2135 = vld [vmem:[%s3 + $0x8] sm:$0xf]
    %v2136 = vld [vmem:[%s3 + $0xc] sm:$0xf]
    %v2137 = vld [vmem:[%s3 + $0x10] sm:$0xf]
    %v2138 = vld [vmem:[%s3 + $0x14] sm:$0xf]
    %v2139 = vld [vmem:[%s3 + $0x18] sm:$0xf]
    %v2140 = vld [vmem:[%s3 + $0x1c] sm:$0xf]
    %v2141 = vld [vmem:[%s3 + $0x20] sm:$0xf]
    %v2142 = vld [vmem:[%s3 + $0x24] sm:$0xf]
    %v2143 = vld [vmem:[%s3 + $0x28] sm:$0xf]
    %v2144 = vld [vmem:[%s3 + $0x2c] sm:$0xf]
    %v2145 = vld [vmem:[%s3 + $0x30] sm:$0xf]
    %v2146 = vld [vmem:[%s3 + $0x34] sm:$0xf]
    %v2147 = vld [vmem:[%s3 + $0x38] sm:$0xf]
    %v2148 = vld [vmem:[%s3 + $0x3c] sm:$0xf]
    %v2149 = vld [vmem:[%s4] sm:$0x1]
    %v2151 = vlaneseq
    %v2152 = vshrl.u32 %v2151, 7
    %v2153 = vsub.s32 0, %v2152
    %v2154 = vrot.slane %v2149, %v2153
    %v2172 = vunpack.c.l.b16 %v2133
    %v2173 = vunpack.c.l.b16 %v2134
    %v2174 = vunpack.c.l.b16 %v2135
    %v2175 = vunpack.c.l.b16 %v2136
    %v2176 = vunpack.c.l.b16 %v2137
    %v2177 = vunpack.c.l.b16 %v2138
    %v2178 = vunpack.c.l.b16 %v2139
    %v2179 = vunpack.c.l.b16 %v2140
    %v2180 = vunpack.c.l.b16 %v2141
    %v2181 = vunpack.c.l.b16 %v2142
    %v2182 = vunpack.c.l.b16 %v2143
    %v2183 = vunpack.c.l.b16 %v2144
    %v2184 = vunpack.c.l.b16 %v2145
    %v2185 = vunpack.c.l.b16 %v2146
    %v2186 = vunpack.c.l.b16 %v2147
    %v2187 = vunpack.c.l.b16 %v2148
    %v2188 = vpack.c.b16 %v2173, %v2172
    %v2189 = vpack.c.b16 %v2175, %v2174
    %v2190 = vpack.c.b16 %v2177, %v2176
    %v2191 = vpack.c.b16 %v2179, %v2178
    %v2192 = vpack.c.b16 %v2181, %v2180
    %v2193 = vpack.c.b16 %v2183, %v2182
    %v2194 = vpack.c.b16 %v2185, %v2184
    %v2195 = vpack.c.b16 %v2187, %v2186
    %2204 = vmatprep.subr.bf16.mxu0 0
    %2205 = vmatpush1.bf16.msra.mxu0 %v2195
    %2206 = vmatprep.subr.bf16.mxu0 0
    %2207 = vmatpush1.bf16.msra.mxu0 %v2194
    %2208 = vmatprep.subr.bf16.mxu0 0
    %2209 = vmatpush1.bf16.msra.mxu0 %v2193
    %2210 = vmatprep.subr.bf16.mxu0 0
    %2211 = vmatpush1.bf16.msra.mxu0 %v2192
    %2212 = vmatprep.subr.bf16.mxu0 0
    %2213 = vmatpush1.bf16.msra.mxu0 %v2191
    %2214 = vmatprep.subr.bf16.mxu0 0
    %2215 = vmatpush1.bf16.msra.mxu0 %v2190
    %2216 = vmatprep.subr.bf16.mxu0 0
    %2217 = vmatpush1.bf16.msra.mxu0 %v2189
    %2218 = vmatprep.subr.bf16.mxu0 0
    %2219 = vmatpush1.bf16.msra.mxu0 %v2188
    %2220 = vmatprep.subr.bf16.mxu0 0
    %2221 = vmatpush2.bf16.msra.mxu0 0
    %2222 = vmatprep.subr.bf16.mxu0 0
    %2223 = vmatpush2.bf16.msra.mxu0 0
    %2224 = vmatprep.subr.bf16.mxu0 0
    %2225 = vmatpush2.bf16.msra.mxu0 0
    %2226 = vmatprep.subr.bf16.mxu0 0
    %2227 = vmatpush2.bf16.msra.mxu0 0
    %2228 = vmatprep.subr.bf16.mxu0 0
    %2229 = vmatpush2.bf16.msra.mxu0 0
    %2230 = vmatprep.subr.bf16.mxu0 0
    %2231 = vmatpush2.bf16.msra.mxu0 0
    %2232 = vmatprep.subr.bf16.mxu0 0
    %2233 = vmatpush2.bf16.msra.mxu0 0
    %2234 = vmatprep.subr.bf16.mxu0 0
    %2235 = vmatpush2.bf16.msra.mxu0 0
    %2236 = vmatprep.mubr.bf16.mxu0 0
    %2237 = vmatmul.mubr.bf16.gmra.mxu0 %v2132
    %v2238 = vpop.f32.mrf.mxu0
    %v2239 = vadd.f32 %v2154, %v2238
    %v2240 = vpop.f32.mrf.mxu0
    %v2241 = vpop.f32.mrf.mxu0
    %v2242 = vpop.f32.mrf.mxu0
    %2243 = vdwg.mxu0
    %v2244 = vmax.f32 %v2239, 0.0
    %v2245 = vpack.c.bf16 %v2244, %v2244
    %v2246 = vld [vmem:[%s5] sm:$0xf]
    %v2247 = vld [vmem:[%s5 + $0x4] sm:$0xf]
    %v2248 = vld [vmem:[%s5 + $0x8] sm:$0xf]
    %v2249 = vld [vmem:[%s5 + $0xc] sm:$0xf]
    %v2250 = vld [vmem:[%s5 + $0x10] sm:$0xf]
    %v2251 = vld [vmem:[%s5 + $0x14] sm:$0xf]
    %v2252 = vld [vmem:[%s5 + $0x18] sm:$0xf]
    %v2253 = vld [vmem:[%s5 + $0x1c] sm:$0xf]
    %v2254 = vld [vmem:[%s6] sm:$0x1]
    %v2256 = vlaneseq
    %v2257 = vshrl.u32 %v2256, 7
    %v2258 = vsub.s32 0, %v2257
    %v2259 = vrot.slane %v2254, %v2258
    %v2269 = vunpack.c.l.b16 %v2246
    %v2270 = vunpack.c.l.b16 %v2247
    %v2271 = vunpack.c.l.b16 %v2248
    %v2272 = vunpack.c.l.b16 %v2249
    %v2273 = vunpack.c.l.b16 %v2250
    %v2274 = vunpack.c.l.b16 %v2251
    %v2275 = vunpack.c.l.b16 %v2252
    %v2276 = vunpack.c.l.b16 %v2253
    %v2277 = vpack.c.b16 %v2270, %v2269
    %v2278 = vpack.c.b16 %v2272, %v2271
    %v2279 = vpack.c.b16 %v2274, %v2273
    %v2280 = vpack.c.b16 %v2276, %v2275
    %vm2285 = vcmask 523264
    %v2287 = vsel %vm2285, %v2245, 0
    %2289 = vmatprep.subr.bf16.mxu0 0
    %2290 = vmatpush1.bf16.msra.mxu0 0
    %2291 = vmatprep.subr.bf16.mxu0 0
    %2292 = vmatpush1.bf16.msra.mxu0 0
    %2293 = vmatprep.subr.bf16.mxu0 0
    %2294 = vmatpush1.bf16.msra.mxu0 0
    %2295 = vmatprep.subr.bf16.mxu0 0
    %2296 = vmatpush1.bf16.msra.mxu0 0
    %2297 = vmatprep.subr.bf16.mxu0 0
    %2298 = vmatpush1.bf16.msra.mxu0 %v2280
    %2299 = vmatprep.subr.bf16.mxu0 0
    %2300 = vmatpush1.bf16.msra.mxu0 %v2279
    %2301 = vmatprep.subr.bf16.mxu0 0
    %2302 = vmatpush1.bf16.msra.mxu0 %v2278
    %2303 = vmatprep.subr.bf16.mxu0 0
    %2304 = vmatpush1.bf16.msra.mxu0 %v2277
    %2305 = vmatprep.subr.bf16.mxu0 0
    %2306 = vmatpush2.bf16.msra.mxu0 0
    %2307 = vmatprep.subr.bf16.mxu0 0
    %2308 = vmatpush2.bf16.msra.mxu0 0
    %2309 = vmatprep.subr.bf16.mxu0 0
    %2310 = vmatpush2.bf16.msra.mxu0 0
    %2311 = vmatprep.subr.bf16.mxu0 0
    %2312 = vmatpush2.bf16.msra.mxu0 0
    %2313 = vmatprep.subr.bf16.mxu0 0
    %2314 = vmatpush2.bf16.msra.mxu0 0
    %2315 = vmatprep.subr.bf16.mxu0 0
    %2316 = vmatpush2.bf16.msra.mxu0 0
    %2317 = vmatprep.subr.bf16.mxu0 0
    %2318 = vmatpush2.bf16.msra.mxu0 0
    %2319 = vmatprep.subr.bf16.mxu0 0
    %2320 = vmatpush2.bf16.msra.mxu0 0
    %2321 = vmatprep.mubr.bf16.mxu0 0
    %2322 = vmatmul.mubr.bf16.gmra.mxu0 %v2287
    %v2323 = vpop.f32.mrf.mxu0
    %v2324 = vadd.f32 %v2259, %v2323
    %v2325 = vpop.f32.mrf.mxu0
    %v2326 = vpop.f32.mrf.mxu0
    %v2327 = vpop.f32.mrf.mxu0
    %2328 = vdwg.mxu0
    %v2329 = vmax.f32 %v2324, 0.0
    %v2330 = vpack.c.bf16 %v2329, %v2329
    %v2331 = vld [vmem:[%s7] sm:$0xf]
    %v2332 = vld [vmem:[%s7 + $0x4] sm:$0xf]
    %v2333 = vld [vmem:[%s7 + $0x8] sm:$0xf]
    %v2334 = vld [vmem:[%s7 + $0xc] sm:$0xf]
    %v2335 = vld [vmem:[%s8] sm:$0x1]
    %v2337 = vlaneseq
    %v2338 = vshrl.u32 %v2337, 7
    %v2339 = vsub.s32 0, %v2338
    %v2340 = vrot.slane %v2335, %v2339
    %v2346 = vunpack.c.l.b16 %v2331
    %v2347 = vunpack.c.l.b16 %v2332
    %v2348 = vunpack.c.l.b16 %v2333
    %v2349 = vunpack.c.l.b16 %v2334
    %v2350 = vpack.c.b16 %v2347, %v2346
    %v2351 = vpack.c.b16 %v2349, %v2348
    %vm2354 = vcmask 261120
    %v2356 = vsel %vm2354, %v2330, 0
    %2358 = vmatprep.subr.bf16.mxu0 0
    %2359 = vmatpush1.bf16.msra.mxu0 0
    %2360 = vmatprep.subr.bf16.mxu0 0
    %2361 = vmatpush1.bf16.msra.mxu0 0
    %2362 = vmatprep.subr.bf16.mxu0 0
    %2363 = vmatpush1.bf16.msra.mxu0 0
    %2364 = vmatprep.subr.bf16.mxu0 0
    %2365 = vmatpush1.bf16.msra.mxu0 0
    %2366 = vmatprep.subr.bf16.mxu0 0
    %2367 = vmatpush1.bf16.msra.mxu0 0
    %2368 = vmatprep.subr.bf16.mxu0 0
    %2369 = vmatpush1.bf16.msra.mxu0 0
    %2370 = vmatprep.subr.bf16.mxu0 0
    %2371 = vmatpush1.bf16.msra.mxu0 %v2351
    %2372 = vmatprep.subr.bf16.mxu0 0
    %2373 = vmatpush1.bf16.msra.mxu0 %v2350
    %2374 = vmatprep.subr.bf16.mxu0 0
    %2375 = vmatpush2.bf16.msra.mxu0 0
    %2376 = vmatprep.subr.bf16.mxu0 0
    %2377 = vmatpush2.bf16.msra.mxu0 0
    %2378 = vmatprep.subr.bf16.mxu0 0
    %2379 = vmatpush2.bf16.msra.mxu0 0
    %2380 = vmatprep.subr.bf16.mxu0 0
    %2381 = vmatpush2.bf16.msra.mxu0 0
    %2382 = vmatprep.subr.bf16.mxu0 0
    %2383 = vmatpush2.bf16.msra.mxu0 0
    %2384 = vmatprep.subr.bf16.mxu0 0
    %2385 = vmatpush2.bf16.msra.mxu0 0
    %2386 = vmatprep.subr.bf16.mxu0 0
    %2387 = vmatpush2.bf16.msra.mxu0 0
    %2388 = vmatprep.subr.bf16.mxu0 0
    %2389 = vmatpush2.bf16.msra.mxu0 0
    %2390 = vmatprep.mubr.bf16.mxu0 0
    %2391 = vmatmul.mubr.bf16.gmra.mxu0 %v2356
    %v2392 = vpop.f32.mrf.mxu0
    %v2393 = vadd.f32 %v2340, %v2392
    %v2394 = vpop.f32.mrf.mxu0
    %v2395 = vpop.f32.mrf.mxu0
    %v2396 = vpop.f32.mrf.mxu0
    %2397 = vdwg.mxu0
    %2398 = vst [vmem:[#allocation7] sm:$0xff] %v2393
    // Predicated region
    $region46: #{tpu_custom_call.1} parent=1 // pred_check
      _
    $region47: #{tpu_custom_call.1} parent=1 // pred_check_branch
      %2400 = sbr.rel (0) target = $region49
    $region48: #{tpu_custom_call.1} parent=1 // pred_region
      %s2402 = ssub.s32 128, 128
      %2403 = vsyncadd [#allocation4], %s2402
      %s2405 = sshll.u32 [#allocation7], 4
      %s2406 = int_to_ptr.vmem [resolvable:$true] %s2405
      %2408 = dma.vmem_to_hbm [thread:$0]  %s2406, 128, %s9, [#allocation4]
    $region49: #{tpu_custom_call.1} parent=1 // pred_fallthru
      _
    // Predicated region
    $region50: #{tpu_custom_call.1} parent=1 // pred_check
      _
    $region51: #{tpu_custom_call.1} parent=1 // pred_check_branch
      %2410 = sbr.rel (0) target = $region53
    $region52: #{tpu_custom_call.1} parent=1 // pred_region
      %2411 = dma.done [#allocation4], 128
    $region53: #{tpu_custom_call.1} parent=1 // pred_fallthru
      _
    %2412 = vsyncpa [#allocation3], 1
    %2413 = vsyncpa [#allocation6], 1
    %2414 = vsyncpa [#allocation4], 1

</llo_original>
